<compile_context>
chip_gen: v7x
topology: tpu7x:2x2x1
jax: 0.10.0
libtpu: 0.0.40
codegen_flags: <defaults>
</compile_context>

<pallas_src>
import math
import functools

import jax
import jax.numpy as jnp
from jax.experimental import pallas as pl
from jax.experimental.pallas import tpu as pltpu

INPUT_SIZE = 10
N_CLASSES = 4
BP = 8  # batch padded to one sublane group


def _round_up(v, m):
    return ((v + m - 1) // m) * m


# ----------------------------------------------------------------------------
# Static layout of the single packed weight buffer (host + kernel share this)
# ----------------------------------------------------------------------------
def _pack_layout(n_hidden, n_layers, bidirectional):
    nd = 2 if bidirectional else 1
    dirh = nd * n_hidden                                   # per-layer state width
    dmax = _round_up(max(INPUT_SIZE, dirh), 8)             # seq width == Wf rows
    dirhp = _round_up(dirh, 8)
    hp = _round_up(n_hidden, 8)
    wcols = max(dirh, N_CLASSES)
    layers = []
    row = 0
    for _ in range(n_layers):
        layers.append(dict(wf=row, b=row + dmax, whh=row + dmax + 8))
        row += dmax + 8 + dirhp
    head_w, head_b = row, row + hp
    rows = row + hp + 8
    return dict(dirh=dirh, dmax=dmax, wcols=wcols, layers=layers,
                head_w=head_w, head_b=head_b, rows=rows)


# ----------------------------------------------------------------------------
# Fused kernel (built per static configuration)
# ----------------------------------------------------------------------------
def make_fused_kernel(*, T, B, H, n_layers, bidirectional, mxu_bf16):
    lay = _pack_layout(H, n_layers, bidirectional)
    dirh, dmax = lay["dirh"], lay["dmax"]
    mx = jnp.bfloat16 if mxu_bf16 else jnp.float32

    def mm(a, b):  # MXU matmul; f32 accumulation always
        return jnp.dot(a.astype(mx), b.astype(mx),
                       preferred_element_type=jnp.float32)

    def kernel(x_ref, w_ref, out_ref, seq_ref, px_ref):
        # ---- stage layer-0 input: time-major, batch padded to 8 rows -------
        xflat = x_ref[...]                                  # (B, T*Din)
        seq_ref[...] = jnp.zeros((T * BP, dmax), jnp.float32)
        for t in range(T):                                  # one-time, tiny
            seq_ref[pl.ds(t * BP, B), pl.ds(0, INPUT_SIZE)] = (
                xflat[:, t * INPUT_SIZE:(t + 1) * INPUT_SIZE])

        last = None
        for li, off in enumerate(lay["layers"]):
            is_last = li == n_layers - 1

            # Packed-weight slices: static, 8-aligned row offsets.
            wf = w_ref[pl.ds(off["wf"], dmax), pl.ds(0, dirh)]    # fused ih
            b = w_ref[pl.ds(off["b"], 1), pl.ds(0, dirh)]         # fused bias
            whh = w_ref[pl.ds(off["whh"], dirh), pl.ds(0, dirh)]  # block-diag

            # Hoisted input projection: one matmul per layer (both directions),
            # bias added exactly once.
            proj = mm(seq_ref[...], wf) + b                       # (T*BP, dirh)

            # px: row-block t holds [fwd-proj(t) | bwd-proj(T-1-t)] so the
            # serial loop only does an aligned load + matmul + tanh.
            px_ref[...] = proj
            if bidirectional:
                for t in range(T):
                    px_ref[pl.ds(t * BP, BP), pl.ds(H, H)] = (
                        proj[(T - 1 - t) * BP:(T - t) * BP, H:dirh])

            # Recurrence: one (BP, dirh) x (dirh, dirh) MXU matmul per step.
            h = jnp.zeros((BP, dirh), jnp.float32)
            last_f = last_b = None
            for t in range(T):                              # fully unrolled
                h = jnp.tanh(px_ref[pl.ds(t * BP, BP), pl.ds(0, dirh)]
                             + mm(h, whh))
                if not is_last:
                    # Next layer's input, written per step at static offsets
                    # (off the h critical path; replaces concat trees).
                    seq_ref[pl.ds(t * BP, BP), pl.ds(0, H)] = h[:, :H]
                    if bidirectional:
                        seq_ref[pl.ds((T - 1 - t) * BP, BP), pl.ds(H, H)] = (
                            h[:, H:])
                else:
                    if t == T - 1:
                        last_f = h[:, :H] if bidirectional else h
                    if bidirectional and t == 0:
                        last_b = h[:, H:]                   # bwd state @ time T-1
            if is_last:
                last = last_f + last_b if bidirectional else last_f

        # ---- head: Linear(H, 4) + Softmax(dim=1), kept in f32 --------------
        w_out = w_ref[pl.ds(lay["head_w"], H), pl.ds(0, N_CLASSES)]
        b_out = w_ref[pl.ds(lay["head_b"], 1), pl.ds(0, N_CLASSES)]
        logits = jnp.dot(last, w_out,
                         preferred_element_type=jnp.float32) + b_out
        m = jnp.max(logits, axis=-1, keepdims=True)
        e = jnp.exp(logits - m)
        denom = jnp.sum(e, axis=-1, keepdims=True)
        probs = e * pl.reciprocal(denom, approx=True)       # EUP slot
        out_ref[...] = probs[0:B, :]

    return kernel, lay


# ----------------------------------------------------------------------------
# Wrapper: one pallas_call, 2 inputs, everything resident in VMEM, no grid
# ----------------------------------------------------------------------------
@functools.partial(jax.jit, static_argnames=("n_hidden", "n_layers",
                                             "bidirectional", "mxu_bf16"))
def genotyping_rnn_forward(x, packed_w, *, n_hidden, n_layers, bidirectional,
                           mxu_bf16=False):
    """x: (B, T, 10) batch-first (PyTorch layout). Returns (B, 4) softmax."""
    B, T, Din = x.shape
    assert Din == INPUT_SIZE and B <= BP

    kernel, lay = make_fused_kernel(T=T, B=B, H=n_hidden, n_layers=n_layers,
                                    bidirectional=bidirectional,
                                    mxu_bf16=mxu_bf16)
    # Contiguous reshape only (layout bitcast; no transpose / pad fusion).
    x2 = x.reshape(B, T * Din)

    vmem = pl.BlockSpec(memory_space=pltpu.MemorySpace.VMEM)
    return pl.pallas_call(
        kernel,
        out_shape=jax.ShapeDtypeStruct((B, N_CLASSES), jnp.float32),
        in_specs=[vmem, vmem],
        out_specs=vmem,
        scratch_shapes=[
            pltpu.VMEM((T * BP, lay["dmax"]), jnp.float32),  # layer in/out seq
            pltpu.VMEM((T * BP, lay["dirh"]), jnp.float32),  # shuffled proj
        ],
    )(x2, packed_w)


# ----------------------------------------------------------------------------
# Parameters (PyTorch-shaped math; weights pre-transposed, biases pre-summed)
# ----------------------------------------------------------------------------
def init_params(key, n_hidden, n_layers, bidirectional):
    """uniform(-1/sqrt(H), 1/sqrt(H)) like PyTorch; b = b_ih + b_hh pre-summed."""
    num_dirs = 2 if bidirectional else 1
    k = 1.0 / math.sqrt(n_hidden)
    params = {"rnn": {}}
    idx = 0
    for layer in range(n_layers):
        in_dim = INPUT_SIZE if layer == 0 else n_hidden * num_dirs
        for d in range(num_dirs):
            ks = jax.random.split(jax.random.fold_in(key, idx), 4)
            idx += 1
            b_ih = jax.random.uniform(ks[2], (1, n_hidden),
                                      minval=-k, maxval=k, dtype=jnp.float32)
            b_hh = jax.random.uniform(ks[3], (1, n_hidden),
                                      minval=-k, maxval=k, dtype=jnp.float32)
            params["rnn"][(layer, d)] = dict(
                w_ih=jax.random.uniform(ks[0], (in_dim, n_hidden),
                                        minval=-k, maxval=k,
                                        dtype=jnp.float32),
                w_hh=jax.random.uniform(ks[1], (n_hidden, n_hidden),
                                        minval=-k, maxval=k,
                                        dtype=jnp.float32),
                b=b_ih + b_hh,
            )
    ks = jax.random.split(jax.random.fold_in(key, 10_000), 2)
    params["w_out"] = jax.random.uniform(ks[0], (n_hidden, N_CLASSES),
                                         minval=-k, maxval=k,
                                         dtype=jnp.float32)
    params["b_out"] = jax.random.uniform(ks[1], (1, N_CLASSES),
                                         minval=-k, maxval=k,
                                         dtype=jnp.float32)
    return params


def pack_params(params, n_hidden, n_layers, bidirectional):
    """One-time host-side packing: fused ih weights, block-diag hh weights,
    fused biases and the head, all in a single (rows, wcols) f32 buffer."""
    lay = _pack_layout(n_hidden, n_layers, bidirectional)
    H, dirh = n_hidden, lay["dirh"]
    buf = jnp.zeros((lay["rows"], lay["wcols"]), jnp.float32)
    for l, off in enumerate(lay["layers"]):
        if bidirectional:
            pf, pb = params["rnn"][(l, 0)], params["rnn"][(l, 1)]
            din = pf["w_ih"].shape[0]
            wf = jnp.concatenate([pf["w_ih"], pb["w_ih"]], axis=1)
            bb = jnp.concatenate([pf["b"], pb["b"]], axis=1)
            buf = buf.at[off["wf"]:off["wf"] + din, 0:dirh].set(wf)
            buf = buf.at[off["b"]:off["b"] + 1, 0:dirh].set(bb)
            buf = buf.at[off["whh"]:off["whh"] + H, 0:H].set(pf["w_hh"])
            buf = buf.at[off["whh"] + H:off["whh"] + 2 * H,
                         H:2 * H].set(pb["w_hh"])
        else:
            p = params["rnn"][(l, 0)]
            din = p["w_ih"].shape[0]
            buf = buf.at[off["wf"]:off["wf"] + din, 0:H].set(p["w_ih"])
            buf = buf.at[off["b"]:off["b"] + 1, 0:H].set(p["b"])
            buf = buf.at[off["whh"]:off["whh"] + H, 0:H].set(p["w_hh"])
    buf = buf.at[lay["head_w"]:lay["head_w"] + H,
                 0:N_CLASSES].set(params["w_out"])
    buf = buf.at[lay["head_b"]:lay["head_b"] + 1,
                 0:N_CLASSES].set(params["b_out"])
    return buf


# ----------------------------------------------------------------------------
# Pure-JAX reference (for correctness check)
# ----------------------------------------------------------------------------
def reference_forward(x, params, *, n_hidden, n_layers, bidirectional):
    B, T, _ = x.shape

    def run_dir(seq, p):  # seq: (T, B, D)
        def step(h, xt):
            h = jnp.tanh(xt @ p["w_ih"] + h @ p["w_hh"] + p["b"])
            return h, h
        h0 = jnp.zeros((B, n_hidden), jnp.float32)
        _, ys = jax.lax.scan(step, h0, seq)
        return ys

    layer_in = jnp.transpose(x, (1, 0, 2))
    for layer in range(n_layers):
        fwd = run_dir(layer_in, params["rnn"][(layer, 0)])
        if bidirectional:
            bwd = run_dir(layer_in[::-1], params["rnn"][(layer, 1)])[::-1]
            layer_in = jnp.concatenate([fwd, bwd], axis=-1)
        else:
            layer_in = fwd
    out = layer_in
    if bidirectional:
        out = out[..., :n_hidden] + out[..., n_hidden:]
    last = out[-1]
    logits = last @ params["w_out"] + params["b_out"]
    return jax.nn.softmax(logits, axis=1)


# TODO(synk): PyTorch's `.squeeze()` on out[:, -1, :] (B==1) and the T==1
# "keep time dim" branch are degenerate edge cases of the original module and
# are not replicated; this implementation always returns (B, 4).

if __name__ == "__main__":
    key = jax.random.PRNGKey(0)
    B, T = 2, 8

    # Config 1: bidirectional, 2 layers, H=32 -- f32 MXU path (exact rewrite;
    # tolerance only loosened for the approx-reciprocal softmax epilogue).
    n_hidden, n_layers, bidir = 32, 2, True
    kx, kp = jax.random.split(key)
    x = jax.random.normal(kx, (B, T, INPUT_SIZE), dtype=jnp.float32)
    params = init_params(kp, n_hidden, n_layers, bidir)
    packed = pack_params(params, n_hidden, n_layers, bidir)

    out = jax.block_until_ready(genotyping_rnn_forward(
        x, packed, n_hidden=n_hidden, n_layers=n_layers, bidirectional=bidir))
    ref = reference_forward(x, params, n_hidden=n_hidden,
                            n_layers=n_layers, bidirectional=bidir)
    assert out.shape == (B, N_CLASSES)
    assert jnp.allclose(jnp.sum(out, axis=1), 1.0, atol=2e-2)
    assert jnp.allclose(out, ref, atol=5e-3, rtol=5e-3)

    # Same config, bf16 MXU operands (recommended fast path on v6e/v7x).
    out_bf16 = jax.block_until_ready(genotyping_rnn_forward(
        x, packed, n_hidden=n_hidden, n_layers=n_layers, bidirectional=bidir,
        mxu_bf16=True))
    assert out_bf16.shape == (B, N_CLASSES)
    assert jnp.allclose(out_bf16, ref, atol=5e-2, rtol=5e-2)

    # Config 2: unidirectional, 1 layer (exercises the other kernel path).
    n_hidden2, n_layers2, bidir2 = 32, 1, False
    params2 = init_params(jax.random.fold_in(kp, 1),
                          n_hidden2, n_layers2, bidir2)
    packed2 = pack_params(params2, n_hidden2, n_layers2, bidir2)
    out2 = jax.block_until_ready(genotyping_rnn_forward(
        x, packed2, n_hidden=n_hidden2, n_layers=n_layers2,
        bidirectional=bidir2))
    ref2 = reference_forward(x, params2, n_hidden=n_hidden2,
                             n_layers=n_layers2, bidirectional=bidir2)
    assert out2.shape == (B, N_CLASSES)
    assert jnp.allclose(out2, ref2, atol=5e-3, rtol=5e-3)

    print("KERNEL_OK")
</pallas_src>

<mosaic_0001>
module attributes {stable_mosaic.version = 11 : i64} {
  func.func @kernel(%arg0: memref<2x80xf32, #tpu.memory_space<vmem>>, %arg1: memref<312x64xf32, #tpu.memory_space<vmem>>, %arg2: memref<2x4xf32, #tpu.memory_space<vmem>>, %arg3: memref<64x64xf32, #tpu.memory_space<vmem>>, %arg4: memref<64x64xf32, #tpu.memory_space<vmem>>) attributes {dimension_semantics = [], scalar_prefetch = 0 : i64, scratch_operands = 2 : i64, tpu.core_type = #tpu.core_type<tc>} {
    %c0 = arith.constant 0 : index
    %c0_0 = arith.constant 0 : index
    %0 = vector.load %arg0[%c0, %c0_0] : memref<2x80xf32, #tpu.memory_space<vmem>>, vector<2x80xf32>
    %cst = arith.constant 0.000000e+00 : f32
    %1 = vector.broadcast %cst : f32 to vector<64x64xf32>
    %c0_1 = arith.constant 0 : index
    %c0_2 = arith.constant 0 : index
    %2 = vector.load %arg3[%c0_1, %c0_2] : memref<64x64xf32, #tpu.memory_space<vmem>>, vector<64x64xf32>
    tpu.vector_store %arg3[%c0_1, %c0_2], %1 {strides = array<i32>} : memref<64x64xf32, #tpu.memory_space<vmem>>, vector<64x64xf32>,
    %3 = vector.extract_strided_slice %0 {offsets = [0, 0], sizes = [2, 10], strides = [1, 1]} : vector<2x80xf32> to vector<2x10xf32>
    %c0_3 = arith.constant 0 : index
    %c0_4 = arith.constant 0 : index
    %4 = vector.load %arg3[%c0_3, %c0_4] : memref<64x64xf32, #tpu.memory_space<vmem>>, vector<2x10xf32>
    tpu.vector_store %arg3[%c0_3, %c0_4], %3 {strides = array<i32>} : memref<64x64xf32, #tpu.memory_space<vmem>>, vector<2x10xf32>,
    %5 = vector.extract_strided_slice %0 {offsets = [0, 10], sizes = [2, 10], strides = [1, 1]} : vector<2x80xf32> to vector<2x10xf32>
    %c8 = arith.constant 8 : index
    %c0_5 = arith.constant 0 : index
    %6 = vector.load %arg3[%c8, %c0_5] : memref<64x64xf32, #tpu.memory_space<vmem>>, vector<2x10xf32>
    tpu.vector_store %arg3[%c8, %c0_5], %5 {strides = array<i32>} : memref<64x64xf32, #tpu.memory_space<vmem>>, vector<2x10xf32>,
    %7 = vector.extract_strided_slice %0 {offsets = [0, 20], sizes = [2, 10], strides = [1, 1]} : vector<2x80xf32> to vector<2x10xf32>
    %c16 = arith.constant 16 : index
    %c0_6 = arith.constant 0 : index
    %8 = vector.load %arg3[%c16, %c0_6] : memref<64x64xf32, #tpu.memory_space<vmem>>, vector<2x10xf32>
    tpu.vector_store %arg3[%c16, %c0_6], %7 {strides = array<i32>} : memref<64x64xf32, #tpu.memory_space<vmem>>, vector<2x10xf32>,
    %9 = vector.extract_strided_slice %0 {offsets = [0, 30], sizes = [2, 10], strides = [1, 1]} : vector<2x80xf32> to vector<2x10xf32>
    %c24 = arith.constant 24 : index
    %c0_7 = arith.constant 0 : index
    %10 = vector.load %arg3[%c24, %c0_7] : memref<64x64xf32, #tpu.memory_space<vmem>>, vector<2x10xf32>
    tpu.vector_store %arg3[%c24, %c0_7], %9 {strides = array<i32>} : memref<64x64xf32, #tpu.memory_space<vmem>>, vector<2x10xf32>,
    %11 = vector.extract_strided_slice %0 {offsets = [0, 40], sizes = [2, 10], strides = [1, 1]} : vector<2x80xf32> to vector<2x10xf32>
    %c32 = arith.constant 32 : index
    %c0_8 = arith.constant 0 : index
    %12 = vector.load %arg3[%c32, %c0_8] : memref<64x64xf32, #tpu.memory_space<vmem>>, vector<2x10xf32>
    tpu.vector_store %arg3[%c32, %c0_8], %11 {strides = array<i32>} : memref<64x64xf32, #tpu.memory_space<vmem>>, vector<2x10xf32>,
    %13 = vector.extract_strided_slice %0 {offsets = [0, 50], sizes = [2, 10], strides = [1, 1]} : vector<2x80xf32> to vector<2x10xf32>
    %c40 = arith.constant 40 : index
    %c0_9 = arith.constant 0 : index
    %14 = vector.load %arg3[%c40, %c0_9] : memref<64x64xf32, #tpu.memory_space<vmem>>, vector<2x10xf32>
    tpu.vector_store %arg3[%c40, %c0_9], %13 {strides = array<i32>} : memref<64x64xf32, #tpu.memory_space<vmem>>, vector<2x10xf32>,
    %15 = vector.extract_strided_slice %0 {offsets = [0, 60], sizes = [2, 10], strides = [1, 1]} : vector<2x80xf32> to vector<2x10xf32>
    %c48 = arith.constant 48 : index
    %c0_10 = arith.constant 0 : index
    %16 = vector.load %arg3[%c48, %c0_10] : memref<64x64xf32, #tpu.memory_space<vmem>>, vector<2x10xf32>
    tpu.vector_store %arg3[%c48, %c0_10], %15 {strides = array<i32>} : memref<64x64xf32, #tpu.memory_space<vmem>>, vector<2x10xf32>,
    %17 = vector.extract_strided_slice %0 {offsets = [0, 70], sizes = [2, 10], strides = [1, 1]} : vector<2x80xf32> to vector<2x10xf32>
    %c56 = arith.constant 56 : index
    %c0_11 = arith.constant 0 : index
    %18 = vector.load %arg3[%c56, %c0_11] : memref<64x64xf32, #tpu.memory_space<vmem>>, vector<2x10xf32>
    tpu.vector_store %arg3[%c56, %c0_11], %17 {strides = array<i32>} : memref<64x64xf32, #tpu.memory_space<vmem>>, vector<2x10xf32>,
    %c0_12 = arith.constant 0 : index
    %c0_13 = arith.constant 0 : index
    %19 = vector.load %arg1[%c0_12, %c0_13] : memref<312x64xf32, #tpu.memory_space<vmem>>, vector<64x64xf32>
    %c64 = arith.constant 64 : index
    %c0_14 = arith.constant 0 : index
    %20 = vector.load %arg1[%c64, %c0_14] : memref<312x64xf32, #tpu.memory_space<vmem>>, vector<1x64xf32>
    %c72 = arith.constant 72 : index
    %c0_15 = arith.constant 0 : index
    %21 = vector.load %arg1[%c72, %c0_15] : memref<312x64xf32, #tpu.memory_space<vmem>>, vector<64x64xf32>
    %c0_16 = arith.constant 0 : index
    %c0_17 = arith.constant 0 : index
    %22 = vector.load %arg3[%c0_16, %c0_17] : memref<64x64xf32, #tpu.memory_space<vmem>>, vector<64x64xf32>
    %cst_18 = arith.constant dense<0.000000e+00> : vector<64x64xf32>
    %23 = tpu.matmul %22, %19, %cst_18 {dimension_numbers = #tpu.dot_dimension_numbers<[1], [0], [0], [1], [0, 0, 1, 1], [], []>} : vector<64x64xf32>, vector<64x64xf32>, vector<64x64xf32> -> vector<64x64xf32>
    %24 = vector.broadcast %20 : vector<1x64xf32> to vector<64x64xf32>
    %25 = arith.addf %23, %24 : vector<64x64xf32>
    %c0_19 = arith.constant 0 : index
    %c0_20 = arith.constant 0 : index
    %26 = vector.load %arg4[%c0_19, %c0_20] : memref<64x64xf32, #tpu.memory_space<vmem>>, vector<64x64xf32>
    tpu.vector_store %arg4[%c0_19, %c0_20], %25 {strides = array<i32>} : memref<64x64xf32, #tpu.memory_space<vmem>>, vector<64x64xf32>,
    %27 = vector.extract_strided_slice %25 {offsets = [56, 32], sizes = [8, 32], strides = [1, 1]} : vector<64x64xf32> to vector<8x32xf32>
    %c0_21 = arith.constant 0 : index
    %c32_22 = arith.constant 32 : index
    %28 = vector.load %arg4[%c0_21, %c32_22] : memref<64x64xf32, #tpu.memory_space<vmem>>, vector<8x32xf32>
    tpu.vector_store %arg4[%c0_21, %c32_22], %27 {strides = array<i32>} : memref<64x64xf32, #tpu.memory_space<vmem>>, vector<8x32xf32>,
    %29 = vector.extract_strided_slice %25 {offsets = [48, 32], sizes = [8, 32], strides = [1, 1]} : vector<64x64xf32> to vector<8x32xf32>
    %c8_23 = arith.constant 8 : index
    %c32_24 = arith.constant 32 : index
    %30 = vector.load %arg4[%c8_23, %c32_24] : memref<64x64xf32, #tpu.memory_space<vmem>>, vector<8x32xf32>
    tpu.vector_store %arg4[%c8_23, %c32_24], %29 {strides = array<i32>} : memref<64x64xf32, #tpu.memory_space<vmem>>, vector<8x32xf32>,
    %31 = vector.extract_strided_slice %25 {offsets = [40, 32], sizes = [8, 32], strides = [1, 1]} : vector<64x64xf32> to vector<8x32xf32>
    %c16_25 = arith.constant 16 : index
    %c32_26 = arith.constant 32 : index
    %32 = vector.load %arg4[%c16_25, %c32_26] : memref<64x64xf32, #tpu.memory_space<vmem>>, vector<8x32xf32>
    tpu.vector_store %arg4[%c16_25, %c32_26], %31 {strides = array<i32>} : memref<64x64xf32, #tpu.memory_space<vmem>>, vector<8x32xf32>,
    %33 = vector.extract_strided_slice %25 {offsets = [32, 32], sizes = [8, 32], strides = [1, 1]} : vector<64x64xf32> to vector<8x32xf32>
    %c24_27 = arith.constant 24 : index
    %c32_28 = arith.constant 32 : index
    %34 = vector.load %arg4[%c24_27, %c32_28] : memref<64x64xf32, #tpu.memory_space<vmem>>, vector<8x32xf32>
    tpu.vector_store %arg4[%c24_27, %c32_28], %33 {strides = array<i32>} : memref<64x64xf32, #tpu.memory_space<vmem>>, vector<8x32xf32>,
    %35 = vector.extract_strided_slice %25 {offsets = [24, 32], sizes = [8, 32], strides = [1, 1]} : vector<64x64xf32> to vector<8x32xf32>
    %c32_29 = arith.constant 32 : index
    %c32_30 = arith.constant 32 : index
    %36 = vector.load %arg4[%c32_29, %c32_30] : memref<64x64xf32, #tpu.memory_space<vmem>>, vector<8x32xf32>
    tpu.vector_store %arg4[%c32_29, %c32_30], %35 {strides = array<i32>} : memref<64x64xf32, #tpu.memory_space<vmem>>, vector<8x32xf32>,
    %37 = vector.extract_strided_slice %25 {offsets = [16, 32], sizes = [8, 32], strides = [1, 1]} : vector<64x64xf32> to vector<8x32xf32>
    %c40_31 = arith.constant 40 : index
    %c32_32 = arith.constant 32 : index
    %38 = vector.load %arg4[%c40_31, %c32_32] : memref<64x64xf32, #tpu.memory_space<vmem>>, vector<8x32xf32>
    tpu.vector_store %arg4[%c40_31, %c32_32], %37 {strides = array<i32>} : memref<64x64xf32, #tpu.memory_space<vmem>>, vector<8x32xf32>,
    %39 = vector.extract_strided_slice %25 {offsets = [8, 32], sizes = [8, 32], strides = [1, 1]} : vector<64x64xf32> to vector<8x32xf32>
    %c48_33 = arith.constant 48 : index
    %c32_34 = arith.constant 32 : index
    %40 = vector.load %arg4[%c48_33, %c32_34] : memref<64x64xf32, #tpu.memory_space<vmem>>, vector<8x32xf32>
    tpu.vector_store %arg4[%c48_33, %c32_34], %39 {strides = array<i32>} : memref<64x64xf32, #tpu.memory_space<vmem>>, vector<8x32xf32>,
    %41 = vector.extract_strided_slice %25 {offsets = [0, 32], sizes = [8, 32], strides = [1, 1]} : vector<64x64xf32> to vector<8x32xf32>
    %c56_35 = arith.constant 56 : index
    %c32_36 = arith.constant 32 : index
    %42 = vector.load %arg4[%c56_35, %c32_36] : memref<64x64xf32, #tpu.memory_space<vmem>>, vector<8x32xf32>
    tpu.vector_store %arg4[%c56_35, %c32_36], %41 {strides = array<i32>} : memref<64x64xf32, #tpu.memory_space<vmem>>, vector<8x32xf32>,
    %cst_37 = arith.constant 0.000000e+00 : f32
    %43 = vector.broadcast %cst_37 : f32 to vector<8x64xf32>
    %c0_38 = arith.constant 0 : index
    %c0_39 = arith.constant 0 : index
    %44 = vector.load %arg4[%c0_38, %c0_39] : memref<64x64xf32, #tpu.memory_space<vmem>>, vector<8x64xf32>
    %cst_40 = arith.constant dense<0.000000e+00> : vector<8x64xf32>
    %45 = tpu.matmul %43, %21, %cst_40 {dimension_numbers = #tpu.dot_dimension_numbers<[1], [0], [0], [1], [0, 0, 1, 1], [], []>} : vector<8x64xf32>, vector<64x64xf32>, vector<8x64xf32> -> vector<8x64xf32>
    %46 = arith.addf %44, %45 : vector<8x64xf32>
    %47 = math.tanh %46 : vector<8x64xf32>
    %48 = vector.extract_strided_slice %47 {offsets = [0, 0], sizes = [8, 32], strides = [1, 1]} : vector<8x64xf32> to vector<8x32xf32>
    %c0_41 = arith.constant 0 : index
    %c0_42 = arith.constant 0 : index
    %49 = vector.load %arg3[%c0_41, %c0_42] : memref<64x64xf32, #tpu.memory_space<vmem>>, vector<8x32xf32>
    tpu.vector_store %arg3[%c0_41, %c0_42], %48 {strides = array<i32>} : memref<64x64xf32, #tpu.memory_space<vmem>>, vector<8x32xf32>,
    %50 = vector.extract_strided_slice %47 {offsets = [0, 32], sizes = [8, 32], strides = [1, 1]} : vector<8x64xf32> to vector<8x32xf32>
    %c56_43 = arith.constant 56 : index
    %c32_44 = arith.constant 32 : index
    %51 = vector.load %arg3[%c56_43, %c32_44] : memref<64x64xf32, #tpu.memory_space<vmem>>, vector<8x32xf32>
    tpu.vector_store %arg3[%c56_43, %c32_44], %50 {strides = array<i32>} : memref<64x64xf32, #tpu.memory_space<vmem>>, vector<8x32xf32>,
    %c8_45 = arith.constant 8 : index
    %c0_46 = arith.constant 0 : index
    %52 = vector.load %arg4[%c8_45, %c0_46] : memref<64x64xf32, #tpu.memory_space<vmem>>, vector<8x64xf32>
    %cst_47 = arith.constant dense<0.000000e+00> : vector<8x64xf32>
    %53 = tpu.matmul %47, %21, %cst_47 {dimension_numbers = #tpu.dot_dimension_numbers<[1], [0], [0], [1], [0, 0, 1, 1], [], []>} : vector<8x64xf32>, vector<64x64xf32>, vector<8x64xf32> -> vector<8x64xf32>
    %54 = arith.addf %52, %53 : vector<8x64xf32>
    %55 = math.tanh %54 : vector<8x64xf32>
    %56 = vector.extract_strided_slice %55 {offsets = [0, 0], sizes = [8, 32], strides = [1, 1]} : vector<8x64xf32> to vector<8x32xf32>
    %c8_48 = arith.constant 8 : index
    %c0_49 = arith.constant 0 : index
    %57 = vector.load %arg3[%c8_48, %c0_49] : memref<64x64xf32, #tpu.memory_space<vmem>>, vector<8x32xf32>
    tpu.vector_store %arg3[%c8_48, %c0_49], %56 {strides = array<i32>} : memref<64x64xf32, #tpu.memory_space<vmem>>, vector<8x32xf32>,
    %58 = vector.extract_strided_slice %55 {offsets = [0, 32], sizes = [8, 32], strides = [1, 1]} : vector<8x64xf32> to vector<8x32xf32>
    %c48_50 = arith.constant 48 : index
    %c32_51 = arith.constant 32 : index
    %59 = vector.load %arg3[%c48_50, %c32_51] : memref<64x64xf32, #tpu.memory_space<vmem>>, vector<8x32xf32>
    tpu.vector_store %arg3[%c48_50, %c32_51], %58 {strides = array<i32>} : memref<64x64xf32, #tpu.memory_space<vmem>>, vector<8x32xf32>,
    %c16_52 = arith.constant 16 : index
    %c0_53 = arith.constant 0 : index
    %60 = vector.load %arg4[%c16_52, %c0_53] : memref<64x64xf32, #tpu.memory_space<vmem>>, vector<8x64xf32>
    %cst_54 = arith.constant dense<0.000000e+00> : vector<8x64xf32>
    %61 = tpu.matmul %55, %21, %cst_54 {dimension_numbers = #tpu.dot_dimension_numbers<[1], [0], [0], [1], [0, 0, 1, 1], [], []>} : vector<8x64xf32>, vector<64x64xf32>, vector<8x64xf32> -> vector<8x64xf32>
    %62 = arith.addf %60, %61 : vector<8x64xf32>
    %63 = math.tanh %62 : vector<8x64xf32>
    %64 = vector.extract_strided_slice %63 {offsets = [0, 0], sizes = [8, 32], strides = [1, 1]} : vector<8x64xf32> to vector<8x32xf32>
    %c16_55 = arith.constant 16 : index
    %c0_56 = arith.constant 0 : index
    %65 = vector.load %arg3[%c16_55, %c0_56] : memref<64x64xf32, #tpu.memory_space<vmem>>, vector<8x32xf32>
    tpu.vector_store %arg3[%c16_55, %c0_56], %64 {strides = array<i32>} : memref<64x64xf32, #tpu.memory_space<vmem>>, vector<8x32xf32>,
    %66 = vector.extract_strided_slice %63 {offsets = [0, 32], sizes = [8, 32], strides = [1, 1]} : vector<8x64xf32> to vector<8x32xf32>
    %c40_57 = arith.constant 40 : index
    %c32_58 = arith.constant 32 : index
    %67 = vector.load %arg3[%c40_57, %c32_58] : memref<64x64xf32, #tpu.memory_space<vmem>>, vector<8x32xf32>
    tpu.vector_store %arg3[%c40_57, %c32_58], %66 {strides = array<i32>} : memref<64x64xf32, #tpu.memory_space<vmem>>, vector<8x32xf32>,
    %c24_59 = arith.constant 24 : index
    %c0_60 = arith.constant 0 : index
    %68 = vector.load %arg4[%c24_59, %c0_60] : memref<64x64xf32, #tpu.memory_space<vmem>>, vector<8x64xf32>
    %cst_61 = arith.constant dense<0.000000e+00> : vector<8x64xf32>
    %69 = tpu.matmul %63, %21, %cst_61 {dimension_numbers = #tpu.dot_dimension_numbers<[1], [0], [0], [1], [0, 0, 1, 1], [], []>} : vector<8x64xf32>, vector<64x64xf32>, vector<8x64xf32> -> vector<8x64xf32>
    %70 = arith.addf %68, %69 : vector<8x64xf32>
    %71 = math.tanh %70 : vector<8x64xf32>
    %72 = vector.extract_strided_slice %71 {offsets = [0, 0], sizes = [8, 32], strides = [1, 1]} : vector<8x64xf32> to vector<8x32xf32>
    %c24_62 = arith.constant 24 : index
    %c0_63 = arith.constant 0 : index
    %73 = vector.load %arg3[%c24_62, %c0_63] : memref<64x64xf32, #tpu.memory_space<vmem>>, vector<8x32xf32>
    tpu.vector_store %arg3[%c24_62, %c0_63], %72 {strides = array<i32>} : memref<64x64xf32, #tpu.memory_space<vmem>>, vector<8x32xf32>,
    %74 = vector.extract_strided_slice %71 {offsets = [0, 32], sizes = [8, 32], strides = [1, 1]} : vector<8x64xf32> to vector<8x32xf32>
    %c32_64 = arith.constant 32 : index
    %c32_65 = arith.constant 32 : index
    %75 = vector.load %arg3[%c32_64, %c32_65] : memref<64x64xf32, #tpu.memory_space<vmem>>, vector<8x32xf32>
    tpu.vector_store %arg3[%c32_64, %c32_65], %74 {strides = array<i32>} : memref<64x64xf32, #tpu.memory_space<vmem>>, vector<8x32xf32>,
    %c32_66 = arith.constant 32 : index
    %c0_67 = arith.constant 0 : index
    %76 = vector.load %arg4[%c32_66, %c0_67] : memref<64x64xf32, #tpu.memory_space<vmem>>, vector<8x64xf32>
    %cst_68 = arith.constant dense<0.000000e+00> : vector<8x64xf32>
    %77 = tpu.matmul %71, %21, %cst_68 {dimension_numbers = #tpu.dot_dimension_numbers<[1], [0], [0], [1], [0, 0, 1, 1], [], []>} : vector<8x64xf32>, vector<64x64xf32>, vector<8x64xf32> -> vector<8x64xf32>
    %78 = arith.addf %76, %77 : vector<8x64xf32>
    %79 = math.tanh %78 : vector<8x64xf32>
    %80 = vector.extract_strided_slice %79 {offsets = [0, 0], sizes = [8, 32], strides = [1, 1]} : vector<8x64xf32> to vector<8x32xf32>
    %c32_69 = arith.constant 32 : index
    %c0_70 = arith.constant 0 : index
    %81 = vector.load %arg3[%c32_69, %c0_70] : memref<64x64xf32, #tpu.memory_space<vmem>>, vector<8x32xf32>
    tpu.vector_store %arg3[%c32_69, %c0_70], %80 {strides = array<i32>} : memref<64x64xf32, #tpu.memory_space<vmem>>, vector<8x32xf32>,
    %82 = vector.extract_strided_slice %79 {offsets = [0, 32], sizes = [8, 32], strides = [1, 1]} : vector<8x64xf32> to vector<8x32xf32>
    %c24_71 = arith.constant 24 : index
    %c32_72 = arith.constant 32 : index
    %83 = vector.load %arg3[%c24_71, %c32_72] : memref<64x64xf32, #tpu.memory_space<vmem>>, vector<8x32xf32>
    tpu.vector_store %arg3[%c24_71, %c32_72], %82 {strides = array<i32>} : memref<64x64xf32, #tpu.memory_space<vmem>>, vector<8x32xf32>,
    %c40_73 = arith.constant 40 : index
    %c0_74 = arith.constant 0 : index
    %84 = vector.load %arg4[%c40_73, %c0_74] : memref<64x64xf32, #tpu.memory_space<vmem>>, vector<8x64xf32>
    %cst_75 = arith.constant dense<0.000000e+00> : vector<8x64xf32>
    %85 = tpu.matmul %79, %21, %cst_75 {dimension_numbers = #tpu.dot_dimension_numbers<[1], [0], [0], [1], [0, 0, 1, 1], [], []>} : vector<8x64xf32>, vector<64x64xf32>, vector<8x64xf32> -> vector<8x64xf32>
    %86 = arith.addf %84, %85 : vector<8x64xf32>
    %87 = math.tanh %86 : vector<8x64xf32>
    %88 = vector.extract_strided_slice %87 {offsets = [0, 0], sizes = [8, 32], strides = [1, 1]} : vector<8x64xf32> to vector<8x32xf32>
    %c40_76 = arith.constant 40 : index
    %c0_77 = arith.constant 0 : index
    %89 = vector.load %arg3[%c40_76, %c0_77] : memref<64x64xf32, #tpu.memory_space<vmem>>, vector<8x32xf32>
    tpu.vector_store %arg3[%c40_76, %c0_77], %88 {strides = array<i32>} : memref<64x64xf32, #tpu.memory_space<vmem>>, vector<8x32xf32>,
    %90 = vector.extract_strided_slice %87 {offsets = [0, 32], sizes = [8, 32], strides = [1, 1]} : vector<8x64xf32> to vector<8x32xf32>
    %c16_78 = arith.constant 16 : index
    %c32_79 = arith.constant 32 : index
    %91 = vector.load %arg3[%c16_78, %c32_79] : memref<64x64xf32, #tpu.memory_space<vmem>>, vector<8x32xf32>
    tpu.vector_store %arg3[%c16_78, %c32_79], %90 {strides = array<i32>} : memref<64x64xf32, #tpu.memory_space<vmem>>, vector<8x32xf32>,
    %c48_80 = arith.constant 48 : index
    %c0_81 = arith.constant 0 : index
    %92 = vector.load %arg4[%c48_80, %c0_81] : memref<64x64xf32, #tpu.memory_space<vmem>>, vector<8x64xf32>
    %cst_82 = arith.constant dense<0.000000e+00> : vector<8x64xf32>
    %93 = tpu.matmul %87, %21, %cst_82 {dimension_numbers = #tpu.dot_dimension_numbers<[1], [0], [0], [1], [0, 0, 1, 1], [], []>} : vector<8x64xf32>, vector<64x64xf32>, vector<8x64xf32> -> vector<8x64xf32>
    %94 = arith.addf %92, %93 : vector<8x64xf32>
    %95 = math.tanh %94 : vector<8x64xf32>
    %96 = vector.extract_strided_slice %95 {offsets = [0, 0], sizes = [8, 32], strides = [1, 1]} : vector<8x64xf32> to vector<8x32xf32>
    %c48_83 = arith.constant 48 : index
    %c0_84 = arith.constant 0 : index
    %97 = vector.load %arg3[%c48_83, %c0_84] : memref<64x64xf32, #tpu.memory_space<vmem>>, vector<8x32xf32>
    tpu.vector_store %arg3[%c48_83, %c0_84], %96 {strides = array<i32>} : memref<64x64xf32, #tpu.memory_space<vmem>>, vector<8x32xf32>,
    %98 = vector.extract_strided_slice %95 {offsets = [0, 32], sizes = [8, 32], strides = [1, 1]} : vector<8x64xf32> to vector<8x32xf32>
    %c8_85 = arith.constant 8 : index
    %c32_86 = arith.constant 32 : index
    %99 = vector.load %arg3[%c8_85, %c32_86] : memref<64x64xf32, #tpu.memory_space<vmem>>, vector<8x32xf32>
    tpu.vector_store %arg3[%c8_85, %c32_86], %98 {strides = array<i32>} : memref<64x64xf32, #tpu.memory_space<vmem>>, vector<8x32xf32>,
    %c56_87 = arith.constant 56 : index
    %c0_88 = arith.constant 0 : index
    %100 = vector.load %arg4[%c56_87, %c0_88] : memref<64x64xf32, #tpu.memory_space<vmem>>, vector<8x64xf32>
    %cst_89 = arith.constant dense<0.000000e+00> : vector<8x64xf32>
    %101 = tpu.matmul %95, %21, %cst_89 {dimension_numbers = #tpu.dot_dimension_numbers<[1], [0], [0], [1], [0, 0, 1, 1], [], []>} : vector<8x64xf32>, vector<64x64xf32>, vector<8x64xf32> -> vector<8x64xf32>
    %102 = arith.addf %100, %101 : vector<8x64xf32>
    %103 = math.tanh %102 : vector<8x64xf32>
    %104 = vector.extract_strided_slice %103 {offsets = [0, 0], sizes = [8, 32], strides = [1, 1]} : vector<8x64xf32> to vector<8x32xf32>
    %c56_90 = arith.constant 56 : index
    %c0_91 = arith.constant 0 : index
    %105 = vector.load %arg3[%c56_90, %c0_91] : memref<64x64xf32, #tpu.memory_space<vmem>>, vector<8x32xf32>
    tpu.vector_store %arg3[%c56_90, %c0_91], %104 {strides = array<i32>} : memref<64x64xf32, #tpu.memory_space<vmem>>, vector<8x32xf32>,
    %106 = vector.extract_strided_slice %103 {offsets = [0, 32], sizes = [8, 32], strides = [1, 1]} : vector<8x64xf32> to vector<8x32xf32>
    %c0_92 = arith.constant 0 : index
    %c32_93 = arith.constant 32 : index
    %107 = vector.load %arg3[%c0_92, %c32_93] : memref<64x64xf32, #tpu.memory_space<vmem>>, vector<8x32xf32>
    tpu.vector_store %arg3[%c0_92, %c32_93], %106 {strides = array<i32>} : memref<64x64xf32, #tpu.memory_space<vmem>>, vector<8x32xf32>,
    %c136 = arith.constant 136 : index
    %c0_94 = arith.constant 0 : index
    %108 = vector.load %arg1[%c136, %c0_94] : memref<312x64xf32, #tpu.memory_space<vmem>>, vector<64x64xf32>
    %c200 = arith.constant 200 : index
    %c0_95 = arith.constant 0 : index
    %109 = vector.load %arg1[%c200, %c0_95] : memref<312x64xf32, #tpu.memory_space<vmem>>, vector<1x64xf32>
    %c208 = arith.constant 208 : index
    %c0_96 = arith.constant 0 : index
    %110 = vector.load %arg1[%c208, %c0_96] : memref<312x64xf32, #tpu.memory_space<vmem>>, vector<64x64xf32>
    %c0_97 = arith.constant 0 : index
    %c0_98 = arith.constant 0 : index
    %111 = vector.load %arg3[%c0_97, %c0_98] : memref<64x64xf32, #tpu.memory_space<vmem>>, vector<64x64xf32>
    %cst_99 = arith.constant dense<0.000000e+00> : vector<64x64xf32>
    %112 = tpu.matmul %111, %108, %cst_99 {dimension_numbers = #tpu.dot_dimension_numbers<[1], [0], [0], [1], [0, 0, 1, 1], [], []>} : vector<64x64xf32>, vector<64x64xf32>, vector<64x64xf32> -> vector<64x64xf32>
    %113 = vector.broadcast %109 : vector<1x64xf32> to vector<64x64xf32>
    %114 = arith.addf %112, %113 : vector<64x64xf32>
    %c0_100 = arith.constant 0 : index
    %c0_101 = arith.constant 0 : index
    %115 = vector.load %arg4[%c0_100, %c0_101] : memref<64x64xf32, #tpu.memory_space<vmem>>, vector<64x64xf32>
    tpu.vector_store %arg4[%c0_100, %c0_101], %114 {strides = array<i32>} : memref<64x64xf32, #tpu.memory_space<vmem>>, vector<64x64xf32>,
    %116 = vector.extract_strided_slice %114 {offsets = [56, 32], sizes = [8, 32], strides = [1, 1]} : vector<64x64xf32> to vector<8x32xf32>
    %c0_102 = arith.constant 0 : index
    %c32_103 = arith.constant 32 : index
    %117 = vector.load %arg4[%c0_102, %c32_103] : memref<64x64xf32, #tpu.memory_space<vmem>>, vector<8x32xf32>
    tpu.vector_store %arg4[%c0_102, %c32_103], %116 {strides = array<i32>} : memref<64x64xf32, #tpu.memory_space<vmem>>, vector<8x32xf32>,
    %118 = vector.extract_strided_slice %114 {offsets = [48, 32], sizes = [8, 32], strides = [1, 1]} : vector<64x64xf32> to vector<8x32xf32>
    %c8_104 = arith.constant 8 : index
    %c32_105 = arith.constant 32 : index
    %119 = vector.load %arg4[%c8_104, %c32_105] : memref<64x64xf32, #tpu.memory_space<vmem>>, vector<8x32xf32>
    tpu.vector_store %arg4[%c8_104, %c32_105], %118 {strides = array<i32>} : memref<64x64xf32, #tpu.memory_space<vmem>>, vector<8x32xf32>,
    %120 = vector.extract_strided_slice %114 {offsets = [40, 32], sizes = [8, 32], strides = [1, 1]} : vector<64x64xf32> to vector<8x32xf32>
    %c16_106 = arith.constant 16 : index
    %c32_107 = arith.constant 32 : index
    %121 = vector.load %arg4[%c16_106, %c32_107] : memref<64x64xf32, #tpu.memory_space<vmem>>, vector<8x32xf32>
    tpu.vector_store %arg4[%c16_106, %c32_107], %120 {strides = array<i32>} : memref<64x64xf32, #tpu.memory_space<vmem>>, vector<8x32xf32>,
    %122 = vector.extract_strided_slice %114 {offsets = [32, 32], sizes = [8, 32], strides = [1, 1]} : vector<64x64xf32> to vector<8x32xf32>
    %c24_108 = arith.constant 24 : index
    %c32_109 = arith.constant 32 : index
    %123 = vector.load %arg4[%c24_108, %c32_109] : memref<64x64xf32, #tpu.memory_space<vmem>>, vector<8x32xf32>
    tpu.vector_store %arg4[%c24_108, %c32_109], %122 {strides = array<i32>} : memref<64x64xf32, #tpu.memory_space<vmem>>, vector<8x32xf32>,
    %124 = vector.extract_strided_slice %114 {offsets = [24, 32], sizes = [8, 32], strides = [1, 1]} : vector<64x64xf32> to vector<8x32xf32>
    %c32_110 = arith.constant 32 : index
    %c32_111 = arith.constant 32 : index
    %125 = vector.load %arg4[%c32_110, %c32_111] : memref<64x64xf32, #tpu.memory_space<vmem>>, vector<8x32xf32>
    tpu.vector_store %arg4[%c32_110, %c32_111], %124 {strides = array<i32>} : memref<64x64xf32, #tpu.memory_space<vmem>>, vector<8x32xf32>,
    %126 = vector.extract_strided_slice %114 {offsets = [16, 32], sizes = [8, 32], strides = [1, 1]} : vector<64x64xf32> to vector<8x32xf32>
    %c40_112 = arith.constant 40 : index
    %c32_113 = arith.constant 32 : index
    %127 = vector.load %arg4[%c40_112, %c32_113] : memref<64x64xf32, #tpu.memory_space<vmem>>, vector<8x32xf32>
    tpu.vector_store %arg4[%c40_112, %c32_113], %126 {strides = array<i32>} : memref<64x64xf32, #tpu.memory_space<vmem>>, vector<8x32xf32>,
    %128 = vector.extract_strided_slice %114 {offsets = [8, 32], sizes = [8, 32], strides = [1, 1]} : vector<64x64xf32> to vector<8x32xf32>
    %c48_114 = arith.constant 48 : index
    %c32_115 = arith.constant 32 : index
    %129 = vector.load %arg4[%c48_114, %c32_115] : memref<64x64xf32, #tpu.memory_space<vmem>>, vector<8x32xf32>
    tpu.vector_store %arg4[%c48_114, %c32_115], %128 {strides = array<i32>} : memref<64x64xf32, #tpu.memory_space<vmem>>, vector<8x32xf32>,
    %130 = vector.extract_strided_slice %114 {offsets = [0, 32], sizes = [8, 32], strides = [1, 1]} : vector<64x64xf32> to vector<8x32xf32>
    %c56_116 = arith.constant 56 : index
    %c32_117 = arith.constant 32 : index
    %131 = vector.load %arg4[%c56_116, %c32_117] : memref<64x64xf32, #tpu.memory_space<vmem>>, vector<8x32xf32>
    tpu.vector_store %arg4[%c56_116, %c32_117], %130 {strides = array<i32>} : memref<64x64xf32, #tpu.memory_space<vmem>>, vector<8x32xf32>,
    %cst_118 = arith.constant 0.000000e+00 : f32
    %132 = vector.broadcast %cst_118 : f32 to vector<8x64xf32>
    %c0_119 = arith.constant 0 : index
    %c0_120 = arith.constant 0 : index
    %133 = vector.load %arg4[%c0_119, %c0_120] : memref<64x64xf32, #tpu.memory_space<vmem>>, vector<8x64xf32>
    %cst_121 = arith.constant dense<0.000000e+00> : vector<8x64xf32>
    %134 = tpu.matmul %132, %110, %cst_121 {dimension_numbers = #tpu.dot_dimension_numbers<[1], [0], [0], [1], [0, 0, 1, 1], [], []>} : vector<8x64xf32>, vector<64x64xf32>, vector<8x64xf32> -> vector<8x64xf32>
    %135 = arith.addf %133, %134 : vector<8x64xf32>
    %136 = math.tanh %135 : vector<8x64xf32>
    %137 = vector.extract_strided_slice %136 {offsets = [0, 32], sizes = [8, 32], strides = [1, 1]} : vector<8x64xf32> to vector<8x32xf32>
    %c8_122 = arith.constant 8 : index
    %c0_123 = arith.constant 0 : index
    %138 = vector.load %arg4[%c8_122, %c0_123] : memref<64x64xf32, #tpu.memory_space<vmem>>, vector<8x64xf32>
    %cst_124 = arith.constant dense<0.000000e+00> : vector<8x64xf32>
    %139 = tpu.matmul %136, %110, %cst_124 {dimension_numbers = #tpu.dot_dimension_numbers<[1], [0], [0], [1], [0, 0, 1, 1], [], []>} : vector<8x64xf32>, vector<64x64xf32>, vector<8x64xf32> -> vector<8x64xf32>
    %140 = arith.addf %138, %139 : vector<8x64xf32>
    %141 = math.tanh %140 : vector<8x64xf32>
    %c16_125 = arith.constant 16 : index
    %c0_126 = arith.constant 0 : index
    %142 = vector.load %arg4[%c16_125, %c0_126] : memref<64x64xf32, #tpu.memory_space<vmem>>, vector<8x64xf32>
    %cst_127 = arith.constant dense<0.000000e+00> : vector<8x64xf32>
    %143 = tpu.matmul %141, %110, %cst_127 {dimension_numbers = #tpu.dot_dimension_numbers<[1], [0], [0], [1], [0, 0, 1, 1], [], []>} : vector<8x64xf32>, vector<64x64xf32>, vector<8x64xf32> -> vector<8x64xf32>
    %144 = arith.addf %142, %143 : vector<8x64xf32>
    %145 = math.tanh %144 : vector<8x64xf32>
    %c24_128 = arith.constant 24 : index
    %c0_129 = arith.constant 0 : index
    %146 = vector.load %arg4[%c24_128, %c0_129] : memref<64x64xf32, #tpu.memory_space<vmem>>, vector<8x64xf32>
    %cst_130 = arith.constant dense<0.000000e+00> : vector<8x64xf32>
    %147 = tpu.matmul %145, %110, %cst_130 {dimension_numbers = #tpu.dot_dimension_numbers<[1], [0], [0], [1], [0, 0, 1, 1], [], []>} : vector<8x64xf32>, vector<64x64xf32>, vector<8x64xf32> -> vector<8x64xf32>
    %148 = arith.addf %146, %147 : vector<8x64xf32>
    %149 = math.tanh %148 : vector<8x64xf32>
    %c32_131 = arith.constant 32 : index
    %c0_132 = arith.constant 0 : index
    %150 = vector.load %arg4[%c32_131, %c0_132] : memref<64x64xf32, #tpu.memory_space<vmem>>, vector<8x64xf32>
    %cst_133 = arith.constant dense<0.000000e+00> : vector<8x64xf32>
    %151 = tpu.matmul %149, %110, %cst_133 {dimension_numbers = #tpu.dot_dimension_numbers<[1], [0], [0], [1], [0, 0, 1, 1], [], []>} : vector<8x64xf32>, vector<64x64xf32>, vector<8x64xf32> -> vector<8x64xf32>
    %152 = arith.addf %150, %151 : vector<8x64xf32>
    %153 = math.tanh %152 : vector<8x64xf32>
    %c40_134 = arith.constant 40 : index
    %c0_135 = arith.constant 0 : index
    %154 = vector.load %arg4[%c40_134, %c0_135] : memref<64x64xf32, #tpu.memory_space<vmem>>, vector<8x64xf32>
    %cst_136 = arith.constant dense<0.000000e+00> : vector<8x64xf32>
    %155 = tpu.matmul %153, %110, %cst_136 {dimension_numbers = #tpu.dot_dimension_numbers<[1], [0], [0], [1], [0, 0, 1, 1], [], []>} : vector<8x64xf32>, vector<64x64xf32>, vector<8x64xf32> -> vector<8x64xf32>
    %156 = arith.addf %154, %155 : vector<8x64xf32>
    %157 = math.tanh %156 : vector<8x64xf32>
    %c48_137 = arith.constant 48 : index
    %c0_138 = arith.constant 0 : index
    %158 = vector.load %arg4[%c48_137, %c0_138] : memref<64x64xf32, #tpu.memory_space<vmem>>, vector<8x64xf32>
    %cst_139 = arith.constant dense<0.000000e+00> : vector<8x64xf32>
    %159 = tpu.matmul %157, %110, %cst_139 {dimension_numbers = #tpu.dot_dimension_numbers<[1], [0], [0], [1], [0, 0, 1, 1], [], []>} : vector<8x64xf32>, vector<64x64xf32>, vector<8x64xf32> -> vector<8x64xf32>
    %160 = arith.addf %158, %159 : vector<8x64xf32>
    %161 = math.tanh %160 : vector<8x64xf32>
    %c56_140 = arith.constant 56 : index
    %c0_141 = arith.constant 0 : index
    %162 = vector.load %arg4[%c56_140, %c0_141] : memref<64x64xf32, #tpu.memory_space<vmem>>, vector<8x64xf32>
    %cst_142 = arith.constant dense<0.000000e+00> : vector<8x64xf32>
    %163 = tpu.matmul %161, %110, %cst_142 {dimension_numbers = #tpu.dot_dimension_numbers<[1], [0], [0], [1], [0, 0, 1, 1], [], []>} : vector<8x64xf32>, vector<64x64xf32>, vector<8x64xf32> -> vector<8x64xf32>
    %164 = arith.addf %162, %163 : vector<8x64xf32>
    %165 = math.tanh %164 : vector<8x64xf32>
    %166 = vector.extract_strided_slice %165 {offsets = [0, 0], sizes = [8, 32], strides = [1, 1]} : vector<8x64xf32> to vector<8x32xf32>
    %167 = arith.addf %166, %137 : vector<8x32xf32>
    %c272 = arith.constant 272 : index
    %c0_143 = arith.constant 0 : index
    %168 = vector.load %arg1[%c272, %c0_143] : memref<312x64xf32, #tpu.memory_space<vmem>>, vector<32x4xf32>
    %c304 = arith.constant 304 : index
    %c0_144 = arith.constant 0 : index
    %169 = vector.load %arg1[%c304, %c0_144] : memref<312x64xf32, #tpu.memory_space<vmem>>, vector<1x4xf32>
    %cst_145 = arith.constant dense<0.000000e+00> : vector<8x4xf32>
    %170 = tpu.matmul %167, %168, %cst_145 {dimension_numbers = #tpu.dot_dimension_numbers<[1], [0], [0], [1], [0, 0, 1, 1], [], []>} : vector<8x32xf32>, vector<32x4xf32>, vector<8x4xf32> -> vector<8x4xf32>
    %171 = vector.broadcast %169 : vector<1x4xf32> to vector<8x4xf32>
    %172 = arith.addf %170, %171 : vector<8x4xf32>
    %cst_146 = arith.constant dense<0xFF800000> : vector<8xf32>
    %173 = vector.multi_reduction <maximumf>, %172, %cst_146 [1] : vector<8x4xf32> to vector<8xf32>
    %174 = vector.shape_cast %173 : vector<8xf32> to vector<8x1xf32>
    %175 = vector.broadcast %174 : vector<8x1xf32> to vector<8x4xf32>
    %176 = arith.subf %172, %175 : vector<8x4xf32>
    %177 = math.exp %176 : vector<8x4xf32>
    %cst_147 = arith.constant dense<0.000000e+00> : vector<8xf32>
    %178 = vector.multi_reduction <add>, %177, %cst_147 [1] : vector<8x4xf32> to vector<8xf32>
    %179 = vector.shape_cast %178 : vector<8xf32> to vector<8x1xf32>
    %180 = tpu.reciprocal %179 {approx = true} : vector<8x1xf32> -> vector<8x1xf32>
    %181 = vector.broadcast %180 : vector<8x1xf32> to vector<8x4xf32>
    %182 = arith.mulf %177, %181 : vector<8x4xf32>
    %183 = vector.extract_strided_slice %182 {offsets = [0, 0], sizes = [2, 4], strides = [1, 1]} : vector<8x4xf32> to vector<2x4xf32>
    %c0_148 = arith.constant 0 : index
    %c0_149 = arith.constant 0 : index
    %184 = vector.load %arg2[%c0_148, %c0_149] : memref<2x4xf32, #tpu.memory_space<vmem>>, vector<2x4xf32>
    tpu.vector_store %arg2[%c0_148, %c0_149], %183 {strides = array<i32>} : memref<2x4xf32, #tpu.memory_space<vmem>>, vector<2x4xf32>,
    return
  }
}

</mosaic_0001>

<llo_original>
// kernel: genotyping_rnn_forward.1
$region0: #{genotyping_rnn_forward.1}
  #allocation0 [shape = 'u32[]', space=smem, size = 0x4, offset = 0x4, fixed_abs, tag = 'smem constant byte address 0x4 - core index']
  #allocation1 [shape = 'u32[144,128]{1,0:T(1,128)}', space=vmem, size = 0x12000, scoped, tag = 'internal scratch']
  #allocation2 [shape = 'f32[64,64]{1,0:T(8,128)}', space=vmem, size = 0x8000, scoped, tag = 'scratch operand']
  #allocation3 [shape = 'f32[64,64]{1,0:T(8,128)}', space=vmem, size = 0x8000, scoped, tag = 'scratch operand']
  %s0 = inlined_call_operand.vmem [shape: f32[2,80], index: 0, kind: input, shape index: {}]
  %s1 = inlined_call_operand.vmem [shape: f32[312,64], index: 1, kind: input, shape index: {}]
  %s2 = inlined_call_operand.hbm [shape: f32[2,4], index: 2, kind: output, shape index: {}]
  %s3 = sld [smem:[#allocation0]]
  $region18: #{genotyping_rnn_forward.1} parent=0
    _
  %s5 = ssub.s32 1, %s3
  %s6 = scalar_select 0, %s5, %s3
  $region1: #{genotyping_rnn_forward.1} parent=0
    #allocation4 [shape = 'u8[1024]{0}', space=vmem, size = 0x400, scoped, tag = 'output window, operand 0, single buffered']
    #allocation5 [shape = 's32[1]{0}', space=sflag, size = 0x4, scoped, tag = 'scoped memory for genotyping_rnn_forward.1']
    %7 = vsyncpa [#allocation5], 0
    // Predicated region
    $region2: #{genotyping_rnn_forward.1} parent=1 // pred_check
      _
    $region3: #{genotyping_rnn_forward.1} parent=1 // pred_check_branch
      %9 = sbr.rel (0) target = $region5
    $region4: #{genotyping_rnn_forward.1} parent=1 // pred_region
      _
    $region5: #{genotyping_rnn_forward.1} parent=1 // pred_fallthru
      _
    // Predicated region
    $region6: #{genotyping_rnn_forward.1} parent=1 // pred_check
      _
    $region7: #{genotyping_rnn_forward.1} parent=1 // pred_check_branch
      %11 = sbr.rel (0) target = $region9
    $region8: #{genotyping_rnn_forward.1} parent=1 // pred_region
      _
    $region9: #{genotyping_rnn_forward.1} parent=1 // pred_fallthru
      _
    %v12 = vld [vmem:[%s0] sm:$0x3]
    %vm13 = vcmask 523264
    %14 = vst.msk [vmem:[#allocation2] sm:$0xff] %vm13, 0.0
    %15 = vst.msk [vmem:[#allocation2 + $0x8] sm:$0xff] %vm13, 0.0
    %16 = vst.msk [vmem:[#allocation2 + $0x10] sm:$0xff] %vm13, 0.0
    %17 = vst.msk [vmem:[#allocation2 + $0x18] sm:$0xff] %vm13, 0.0
    %18 = vst.msk [vmem:[#allocation2 + $0x20] sm:$0xff] %vm13, 0.0
    %19 = vst.msk [vmem:[#allocation2 + $0x28] sm:$0xff] %vm13, 0.0
    %20 = vst.msk [vmem:[#allocation2 + $0x30] sm:$0xff] %vm13, 0.0
    %21 = vst.msk [vmem:[#allocation2 + $0x38] sm:$0xff] %vm13, 0.0
    %vm22 = vcmask 74752
    %23 = vst.msk [vmem:[#allocation2] sm:$0x3] %vm22, %v12
    %25 = vrot.lane.b32.xlu0 %v12, 118
    %v26 = vpop.permute.xlu0 %25
    %28 = vst.msk [vmem:[#allocation2 + $0x8] sm:$0x3] %vm22, %v26
    %29 = vrot.lane.b32.xlu0 %v12, 108
    %v30 = vpop.permute.xlu0 %29
    %32 = vst.msk [vmem:[#allocation2 + $0x10] sm:$0x3] %vm22, %v30
    %33 = vrot.lane.b32.xlu0 %v12, 98
    %v34 = vpop.permute.xlu0 %33
    %36 = vst.msk [vmem:[#allocation2 + $0x18] sm:$0x3] %vm22, %v34
    %37 = vrot.lane.b32.xlu0 %v12, 88
    %v38 = vpop.permute.xlu0 %37
    %40 = vst.msk [vmem:[#allocation2 + $0x20] sm:$0x3] %vm22, %v38
    %41 = vrot.lane.b32.xlu0 %v12, 78
    %v42 = vpop.permute.xlu0 %41
    %44 = vst.msk [vmem:[#allocation2 + $0x28] sm:$0x3] %vm22, %v42
    %45 = vrot.lane.b32.xlu0 %v12, 68
    %v46 = vpop.permute.xlu0 %45
    %48 = vst.msk [vmem:[#allocation2 + $0x30] sm:$0x3] %vm22, %v46
    %49 = vrot.lane.b32.xlu0 %v12, 58
    %v50 = vpop.permute.xlu0 %49
    %52 = vst.msk [vmem:[#allocation2 + $0x38] sm:$0x3] %vm22, %v50
    %v53 = vld [vmem:[%s1] sm:$0xff]
    %v54 = vld [vmem:[%s1 + $0x8] sm:$0xff]
    %v55 = vld [vmem:[%s1 + $0x10] sm:$0xff]
    %v56 = vld [vmem:[%s1 + $0x18] sm:$0xff]
    %v57 = vld [vmem:[%s1 + $0x20] sm:$0xff]
    %v58 = vld [vmem:[%s1 + $0x28] sm:$0xff]
    %v59 = vld [vmem:[%s1 + $0x30] sm:$0xff]
    %v60 = vld [vmem:[%s1 + $0x38] sm:$0xff]
    %v61 = vld [vmem:[%s1 + $0x40] sm:$0x1]
    %v62 = vld [vmem:[%s1 + $0x48] sm:$0xff]
    %v63 = vld [vmem:[%s1 + $0x50] sm:$0xff]
    %v64 = vld [vmem:[%s1 + $0x58] sm:$0xff]
    %v65 = vld [vmem:[%s1 + $0x60] sm:$0xff]
    %v66 = vld [vmem:[%s1 + $0x68] sm:$0xff]
    %v67 = vld [vmem:[%s1 + $0x70] sm:$0xff]
    %v68 = vld [vmem:[%s1 + $0x78] sm:$0xff]
    %v69 = vld [vmem:[%s1 + $0x80] sm:$0xff]
    %v70 = vld [vmem:[#allocation2] sm:$0xff]
    %v71 = vld [vmem:[#allocation2 + $0x8] sm:$0xff]
    %v72 = vld [vmem:[#allocation2 + $0x10] sm:$0xff]
    %v73 = vld [vmem:[#allocation2 + $0x18] sm:$0xff]
    %v74 = vld [vmem:[#allocation2 + $0x20] sm:$0xff]
    %v75 = vld [vmem:[#allocation2 + $0x28] sm:$0xff]
    %v76 = vld [vmem:[#allocation2 + $0x30] sm:$0xff]
    %v77 = vld [vmem:[#allocation2 + $0x38] sm:$0xff]
    %v78 = vlaneseq
    %v79 = vshrl.u32 %v78, 7
    %v80 = vsub.s32 0, %v79
    %v81 = vrot.slane %v61, %v80
    %v83 = vsel %vm13, %v70, 0
    %v86 = vsel %vm13, %v71, 0
    %v89 = vsel %vm13, %v72, 0
    %v92 = vsel %vm13, %v73, 0
    %v95 = vsel %vm13, %v74, 0
    %v98 = vsel %vm13, %v75, 0
    %v101 = vsel %vm13, %v76, 0
    %v104 = vsel %vm13, %v77, 0
    %106 = vmatprep.subr.mxu0 0.0
    %107 = vmatpush1.msra.mxu0 %v53
    %108 = vmatprep.subr.mxu0 0.0
    %109 = vmatpush1.msra.mxu0 %v54
    %110 = vmatprep.subr.mxu0 0.0
    %111 = vmatpush1.msra.mxu0 %v55
    %112 = vmatprep.subr.mxu0 0.0
    %113 = vmatpush1.msra.mxu0 %v56
    %114 = vmatprep.subr.mxu0 0.0
    %115 = vmatpush1.msra.mxu0 %v57
    %116 = vmatprep.subr.mxu0 0.0
    %117 = vmatpush1.msra.mxu0 %v58
    %118 = vmatprep.subr.mxu0 0.0
    %119 = vmatpush1.msra.mxu0 %v59
    %120 = vmatprep.subr.mxu0 0.0
    %121 = vmatpush1.msra.mxu0 %v60
    %122 = vmatprep.subr.mxu0 0.0
    %123 = vmatpush1.msra.mxu0 0.0
    %124 = vmatprep.subr.mxu0 0.0
    %125 = vmatpush1.msra.mxu0 0.0
    %126 = vmatprep.subr.mxu0 0.0
    %127 = vmatpush1.msra.mxu0 0.0
    %128 = vmatprep.subr.mxu0 0.0
    %129 = vmatpush1.msra.mxu0 0.0
    %130 = vmatprep.subr.mxu0 0.0
    %131 = vmatpush1.msra.mxu0 0.0
    %132 = vmatprep.subr.mxu0 0.0
    %133 = vmatpush1.msra.mxu0 0.0
    %134 = vmatprep.subr.mxu0 0.0
    %135 = vmatpush1.msra.mxu0 0.0
    %136 = vmatprep.subr.mxu0 0.0
    %137 = vmatpush1.msra.mxu0 0.0
    %138 = vmatprep.subr.mxu0 0.0
    %139 = vmatpush1.msra.mxu0 0.0
    %140 = vmatprep.subr.mxu0 0.0
    %141 = vmatpush1.msra.mxu0 0.0
    %142 = vmatprep.subr.mxu0 0.0
    %143 = vmatpush1.msra.mxu0 0.0
    %144 = vmatprep.subr.mxu0 0.0
    %145 = vmatpush1.msra.mxu0 0.0
    %146 = vmatprep.subr.mxu0 0.0
    %147 = vmatpush1.msra.mxu0 0.0
    %148 = vmatprep.subr.mxu0 0.0
    %149 = vmatpush1.msra.mxu0 0.0
    %150 = vmatprep.subr.mxu0 0.0
    %151 = vmatpush1.msra.mxu0 0.0
    %152 = vmatprep.subr.mxu0 0.0
    %153 = vmatpush1.msra.mxu0 0.0
    %154 = vmatprep.subr.mxu0 0.0
    %155 = vmatpush1.msra.mxu0 0.0
    %156 = vmatprep.subr.mxu0 0.0
    %157 = vmatpush1.msra.mxu0 0.0
    %158 = vmatprep.subr.mxu0 0.0
    %159 = vmatpush1.msra.mxu0 0.0
    %160 = vmatprep.subr.mxu0 0.0
    %161 = vmatpush1.msra.mxu0 0.0
    %162 = vmatprep.subr.mxu0 0.0
    %163 = vmatpush1.msra.mxu0 0.0
    %164 = vmatprep.subr.mxu0 0.0
    %165 = vmatpush1.msra.mxu0 0.0
    %166 = vmatprep.subr.mxu0 0.0
    %167 = vmatpush1.msra.mxu0 0.0
    %168 = vmatprep.subr.mxu0 0.0
    %169 = vmatpush1.msra.mxu0 0.0
    %170 = vmatprep.mubr.f32.mxu0 0.0
    %171 = vmatmul.mubr.f32.gmra.mrb[0].mxu0 %v83
    %v172 = vpop.f32.mrb[0].mxu0
    %v173 = vadd.f32 %v81, %v172
    %v174 = vpop.f32.mrb[0].mxu0
    %175 = vmatprep.mubr.f32.mxu0 0.0
    %176 = vmatmul.mubr.f32.gmra.mrb[0].mxu0 %v86
    %v177 = vpop.f32.mrb[0].mxu0
    %v178 = vadd.f32 %v81, %v177
    %v179 = vpop.f32.mrb[0].mxu0
    %180 = vmatprep.mubr.f32.mxu0 0.0
    %181 = vmatmul.mubr.f32.gmra.mrb[0].mxu0 %v89
    %v182 = vpop.f32.mrb[0].mxu0
    %v183 = vadd.f32 %v81, %v182
    %v184 = vpop.f32.mrb[0].mxu0
    %185 = vmatprep.mubr.f32.mxu0 0.0
    %186 = vmatmul.mubr.f32.gmra.mrb[0].mxu0 %v92
    %v187 = vpop.f32.mrb[0].mxu0
    %v188 = vadd.f32 %v81, %v187
    %v189 = vpop.f32.mrb[0].mxu0
    %190 = vmatprep.mubr.f32.mxu0 0.0
    %191 = vmatmul.mubr.f32.gmra.mrb[0].mxu0 %v95
    %v192 = vpop.f32.mrb[0].mxu0
    %v193 = vadd.f32 %v81, %v192
    %v194 = vpop.f32.mrb[0].mxu0
    %195 = vmatprep.mubr.f32.mxu0 0.0
    %196 = vmatmul.mubr.f32.gmra.mrb[0].mxu0 %v98
    %v197 = vpop.f32.mrb[0].mxu0
    %v198 = vadd.f32 %v81, %v197
    %v199 = vpop.f32.mrb[0].mxu0
    %200 = vmatprep.mubr.f32.mxu0 0.0
    %201 = vmatmul.mubr.f32.gmra.mrb[0].mxu0 %v101
    %v202 = vpop.f32.mrb[0].mxu0
    %v203 = vadd.f32 %v81, %v202
    %v204 = vpop.f32.mrb[0].mxu0
    %205 = vmatprep.mubr.f32.mxu0 0.0
    %206 = vmatmul.mubr.f32.gmra.mrb[0].mxu0 %v104
    %v207 = vpop.f32.mrb[0].mxu0
    %v208 = vadd.f32 %v81, %v207
    %v209 = vpop.f32.mrb[0].mxu0
    %210 = vdwg.mxu0
    %211 = vst.msk [vmem:[#allocation3] sm:$0xff] %vm13, %v173
    %212 = vst.msk [vmem:[#allocation3 + $0x8] sm:$0xff] %vm13, %v178
    %213 = vst.msk [vmem:[#allocation3 + $0x10] sm:$0xff] %vm13, %v183
    %214 = vst.msk [vmem:[#allocation3 + $0x18] sm:$0xff] %vm13, %v188
    %215 = vst.msk [vmem:[#allocation3 + $0x20] sm:$0xff] %vm13, %v193
    %216 = vst.msk [vmem:[#allocation3 + $0x28] sm:$0xff] %vm13, %v198
    %217 = vst.msk [vmem:[#allocation3 + $0x30] sm:$0xff] %vm13, %v203
    %218 = vst.msk [vmem:[#allocation3 + $0x38] sm:$0xff] %vm13, %v208
    %vm219 = vcmask 523520
    %220 = vst.msk [vmem:[#allocation3] sm:$0xff] %vm219, %v208
    %221 = vst.msk [vmem:[#allocation3 + $0x8] sm:$0xff] %vm219, %v203
    %222 = vst.msk [vmem:[#allocation3 + $0x10] sm:$0xff] %vm219, %v198
    %223 = vst.msk [vmem:[#allocation3 + $0x18] sm:$0xff] %vm219, %v193
    %224 = vst.msk [vmem:[#allocation3 + $0x20] sm:$0xff] %vm219, %v188
    %225 = vst.msk [vmem:[#allocation3 + $0x28] sm:$0xff] %vm219, %v183
    %226 = vst.msk [vmem:[#allocation3 + $0x30] sm:$0xff] %vm219, %v178
    %227 = vst.msk [vmem:[#allocation3 + $0x38] sm:$0xff] %vm219, %v173
    %v228 = vld [vmem:[#allocation3] sm:$0xff]
    %v230 = vsel %vm13, 0.0, 0
    %232 = vmatprep.subr.mxu0 0.0
    %233 = vmatpush1.msra.mxu0 %v62
    %234 = vmatprep.subr.mxu0 0.0
    %235 = vmatpush1.msra.mxu0 %v63
    %236 = vmatprep.subr.mxu0 0.0
    %237 = vmatpush1.msra.mxu0 %v64
    %238 = vmatprep.subr.mxu0 0.0
    %239 = vmatpush1.msra.mxu0 %v65
    %240 = vmatprep.subr.mxu0 0.0
    %241 = vmatpush1.msra.mxu0 %v66
    %242 = vmatprep.subr.mxu0 0.0
    %243 = vmatpush1.msra.mxu0 %v67
    %244 = vmatprep.subr.mxu0 0.0
    %245 = vmatpush1.msra.mxu0 %v68
    %246 = vmatprep.subr.mxu0 0.0
    %247 = vmatpush1.msra.mxu0 %v69
    %248 = vmatprep.subr.mxu0 0.0
    %249 = vmatpush1.msra.mxu0 0.0
    %250 = vmatprep.subr.mxu0 0.0
    %251 = vmatpush1.msra.mxu0 0.0
    %252 = vmatprep.subr.mxu0 0.0
    %253 = vmatpush1.msra.mxu0 0.0
    %254 = vmatprep.subr.mxu0 0.0
    %255 = vmatpush1.msra.mxu0 0.0
    %256 = vmatprep.subr.mxu0 0.0
    %257 = vmatpush1.msra.mxu0 0.0
    %258 = vmatprep.subr.mxu0 0.0
    %259 = vmatpush1.msra.mxu0 0.0
    %260 = vmatprep.subr.mxu0 0.0
    %261 = vmatpush1.msra.mxu0 0.0
    %262 = vmatprep.subr.mxu0 0.0
    %263 = vmatpush1.msra.mxu0 0.0
    %264 = vmatprep.subr.mxu0 0.0
    %265 = vmatpush1.msra.mxu0 0.0
    %266 = vmatprep.subr.mxu0 0.0
    %267 = vmatpush1.msra.mxu0 0.0
    %268 = vmatprep.subr.mxu0 0.0
    %269 = vmatpush1.msra.mxu0 0.0
    %270 = vmatprep.subr.mxu0 0.0
    %271 = vmatpush1.msra.mxu0 0.0
    %272 = vmatprep.subr.mxu0 0.0
    %273 = vmatpush1.msra.mxu0 0.0
    %274 = vmatprep.subr.mxu0 0.0
    %275 = vmatpush1.msra.mxu0 0.0
    %276 = vmatprep.subr.mxu0 0.0
    %277 = vmatpush1.msra.mxu0 0.0
    %278 = vmatprep.subr.mxu0 0.0
    %279 = vmatpush1.msra.mxu0 0.0
    %280 = vmatprep.subr.mxu0 0.0
    %281 = vmatpush1.msra.mxu0 0.0
    %282 = vmatprep.subr.mxu0 0.0
    %283 = vmatpush1.msra.mxu0 0.0
    %284 = vmatprep.subr.mxu0 0.0
    %285 = vmatpush1.msra.mxu0 0.0
    %286 = vmatprep.subr.mxu0 0.0
    %287 = vmatpush1.msra.mxu0 0.0
    %288 = vmatprep.subr.mxu0 0.0
    %289 = vmatpush1.msra.mxu0 0.0
    %290 = vmatprep.subr.mxu0 0.0
    %291 = vmatpush1.msra.mxu0 0.0
    %292 = vmatprep.subr.mxu0 0.0
    %293 = vmatpush1.msra.mxu0 0.0
    %294 = vmatprep.subr.mxu0 0.0
    %295 = vmatpush1.msra.mxu0 0.0
    %296 = vmatprep.mubr.f32.mxu0 0.0
    %297 = vmatmul.mubr.f32.gmra.mrb[0].mxu0 %v230
    %v298 = vpop.f32.mrb[0].mxu0
    %v299 = vadd.f32 0.0, %v298
    %v300 = vpop.f32.mrb[0].mxu0
    %301 = vdwg.mxu0
    %v302 = vadd.f32 %v228, %v299
    %v303 = vtanh.pop %v302
    %vm304 = vcmask 261120
    %305 = vst.msk [vmem:[#allocation2] sm:$0xff] %vm304, %v303
    %306 = vst.msk [vmem:[#allocation2 + $0x38] sm:$0xff] %vm219, %v303
    %v307 = vld [vmem:[#allocation3 + $0x8] sm:$0xff]
    %v309 = vsel %vm13, %v303, 0
    %311 = vmatprep.subr.mxu0 0.0
    %312 = vmatpush1.msra.mxu0 %v62
    %313 = vmatprep.subr.mxu0 0.0
    %314 = vmatpush1.msra.mxu0 %v63
    %315 = vmatprep.subr.mxu0 0.0
    %316 = vmatpush1.msra.mxu0 %v64
    %317 = vmatprep.subr.mxu0 0.0
    %318 = vmatpush1.msra.mxu0 %v65
    %319 = vmatprep.subr.mxu0 0.0
    %320 = vmatpush1.msra.mxu0 %v66
    %321 = vmatprep.subr.mxu0 0.0
    %322 = vmatpush1.msra.mxu0 %v67
    %323 = vmatprep.subr.mxu0 0.0
    %324 = vmatpush1.msra.mxu0 %v68
    %325 = vmatprep.subr.mxu0 0.0
    %326 = vmatpush1.msra.mxu0 %v69
    %327 = vmatprep.subr.mxu0 0.0
    %328 = vmatpush1.msra.mxu0 0.0
    %329 = vmatprep.subr.mxu0 0.0
    %330 = vmatpush1.msra.mxu0 0.0
    %331 = vmatprep.subr.mxu0 0.0
    %332 = vmatpush1.msra.mxu0 0.0
    %333 = vmatprep.subr.mxu0 0.0
    %334 = vmatpush1.msra.mxu0 0.0
    %335 = vmatprep.subr.mxu0 0.0
    %336 = vmatpush1.msra.mxu0 0.0
    %337 = vmatprep.subr.mxu0 0.0
    %338 = vmatpush1.msra.mxu0 0.0
    %339 = vmatprep.subr.mxu0 0.0
    %340 = vmatpush1.msra.mxu0 0.0
    %341 = vmatprep.subr.mxu0 0.0
    %342 = vmatpush1.msra.mxu0 0.0
    %343 = vmatprep.subr.mxu0 0.0
    %344 = vmatpush1.msra.mxu0 0.0
    %345 = vmatprep.subr.mxu0 0.0
    %346 = vmatpush1.msra.mxu0 0.0
    %347 = vmatprep.subr.mxu0 0.0
    %348 = vmatpush1.msra.mxu0 0.0
    %349 = vmatprep.subr.mxu0 0.0
    %350 = vmatpush1.msra.mxu0 0.0
    %351 = vmatprep.subr.mxu0 0.0
    %352 = vmatpush1.msra.mxu0 0.0
    %353 = vmatprep.subr.mxu0 0.0
    %354 = vmatpush1.msra.mxu0 0.0
    %355 = vmatprep.subr.mxu0 0.0
    %356 = vmatpush1.msra.mxu0 0.0
    %357 = vmatprep.subr.mxu0 0.0
    %358 = vmatpush1.msra.mxu0 0.0
    %359 = vmatprep.subr.mxu0 0.0
    %360 = vmatpush1.msra.mxu0 0.0
    %361 = vmatprep.subr.mxu0 0.0
    %362 = vmatpush1.msra.mxu0 0.0
    %363 = vmatprep.subr.mxu0 0.0
    %364 = vmatpush1.msra.mxu0 0.0
    %365 = vmatprep.subr.mxu0 0.0
    %366 = vmatpush1.msra.mxu0 0.0
    %367 = vmatprep.subr.mxu0 0.0
    %368 = vmatpush1.msra.mxu0 0.0
    %369 = vmatprep.subr.mxu0 0.0
    %370 = vmatpush1.msra.mxu0 0.0
    %371 = vmatprep.subr.mxu0 0.0
    %372 = vmatpush1.msra.mxu0 0.0
    %373 = vmatprep.subr.mxu0 0.0
    %374 = vmatpush1.msra.mxu0 0.0
    %375 = vmatprep.mubr.f32.mxu0 0.0
    %376 = vmatmul.mubr.f32.gmra.mrb[0].mxu0 %v309
    %v377 = vpop.f32.mrb[0].mxu0
    %v378 = vadd.f32 0.0, %v377
    %v379 = vpop.f32.mrb[0].mxu0
    %380 = vdwg.mxu0
    %v381 = vadd.f32 %v307, %v378
    %v382 = vtanh.pop %v381
    %383 = vst.msk [vmem:[#allocation2 + $0x8] sm:$0xff] %vm304, %v382
    %384 = vst.msk [vmem:[#allocation2 + $0x30] sm:$0xff] %vm219, %v382
    %v385 = vld [vmem:[#allocation3 + $0x10] sm:$0xff]
    %v387 = vsel %vm13, %v382, 0
    %389 = vmatprep.subr.mxu0 0.0
    %390 = vmatpush1.msra.mxu0 %v62
    %391 = vmatprep.subr.mxu0 0.0
    %392 = vmatpush1.msra.mxu0 %v63
    %393 = vmatprep.subr.mxu0 0.0
    %394 = vmatpush1.msra.mxu0 %v64
    %395 = vmatprep.subr.mxu0 0.0
    %396 = vmatpush1.msra.mxu0 %v65
    %397 = vmatprep.subr.mxu0 0.0
    %398 = vmatpush1.msra.mxu0 %v66
    %399 = vmatprep.subr.mxu0 0.0
    %400 = vmatpush1.msra.mxu0 %v67
    %401 = vmatprep.subr.mxu0 0.0
    %402 = vmatpush1.msra.mxu0 %v68
    %403 = vmatprep.subr.mxu0 0.0
    %404 = vmatpush1.msra.mxu0 %v69
    %405 = vmatprep.subr.mxu0 0.0
    %406 = vmatpush1.msra.mxu0 0.0
    %407 = vmatprep.subr.mxu0 0.0
    %408 = vmatpush1.msra.mxu0 0.0
    %409 = vmatprep.subr.mxu0 0.0
    %410 = vmatpush1.msra.mxu0 0.0
    %411 = vmatprep.subr.mxu0 0.0
    %412 = vmatpush1.msra.mxu0 0.0
    %413 = vmatprep.subr.mxu0 0.0
    %414 = vmatpush1.msra.mxu0 0.0
    %415 = vmatprep.subr.mxu0 0.0
    %416 = vmatpush1.msra.mxu0 0.0
    %417 = vmatprep.subr.mxu0 0.0
    %418 = vmatpush1.msra.mxu0 0.0
    %419 = vmatprep.subr.mxu0 0.0
    %420 = vmatpush1.msra.mxu0 0.0
    %421 = vmatprep.subr.mxu0 0.0
    %422 = vmatpush1.msra.mxu0 0.0
    %423 = vmatprep.subr.mxu0 0.0
    %424 = vmatpush1.msra.mxu0 0.0
    %425 = vmatprep.subr.mxu0 0.0
    %426 = vmatpush1.msra.mxu0 0.0
    %427 = vmatprep.subr.mxu0 0.0
    %428 = vmatpush1.msra.mxu0 0.0
    %429 = vmatprep.subr.mxu0 0.0
    %430 = vmatpush1.msra.mxu0 0.0
    %431 = vmatprep.subr.mxu0 0.0
    %432 = vmatpush1.msra.mxu0 0.0
    %433 = vmatprep.subr.mxu0 0.0
    %434 = vmatpush1.msra.mxu0 0.0
    %435 = vmatprep.subr.mxu0 0.0
    %436 = vmatpush1.msra.mxu0 0.0
    %437 = vmatprep.subr.mxu0 0.0
    %438 = vmatpush1.msra.mxu0 0.0
    %439 = vmatprep.subr.mxu0 0.0
    %440 = vmatpush1.msra.mxu0 0.0
    %441 = vmatprep.subr.mxu0 0.0
    %442 = vmatpush1.msra.mxu0 0.0
    %443 = vmatprep.subr.mxu0 0.0
    %444 = vmatpush1.msra.mxu0 0.0
    %445 = vmatprep.subr.mxu0 0.0
    %446 = vmatpush1.msra.mxu0 0.0
    %447 = vmatprep.subr.mxu0 0.0
    %448 = vmatpush1.msra.mxu0 0.0
    %449 = vmatprep.subr.mxu0 0.0
    %450 = vmatpush1.msra.mxu0 0.0
    %451 = vmatprep.subr.mxu0 0.0
    %452 = vmatpush1.msra.mxu0 0.0
    %453 = vmatprep.mubr.f32.mxu0 0.0
    %454 = vmatmul.mubr.f32.gmra.mrb[0].mxu0 %v387
    %v455 = vpop.f32.mrb[0].mxu0
    %v456 = vadd.f32 0.0, %v455
    %v457 = vpop.f32.mrb[0].mxu0
    %458 = vdwg.mxu0
    %v459 = vadd.f32 %v385, %v456
    %v460 = vtanh.pop %v459
    %461 = vst.msk [vmem:[#allocation2 + $0x10] sm:$0xff] %vm304, %v460
    %462 = vst.msk [vmem:[#allocation2 + $0x28] sm:$0xff] %vm219, %v460
    %v463 = vld [vmem:[#allocation3 + $0x18] sm:$0xff]
    %v465 = vsel %vm13, %v460, 0
    %467 = vmatprep.subr.mxu0 0.0
    %468 = vmatpush1.msra.mxu0 %v62
    %469 = vmatprep.subr.mxu0 0.0
    %470 = vmatpush1.msra.mxu0 %v63
    %471 = vmatprep.subr.mxu0 0.0
    %472 = vmatpush1.msra.mxu0 %v64
    %473 = vmatprep.subr.mxu0 0.0
    %474 = vmatpush1.msra.mxu0 %v65
    %475 = vmatprep.subr.mxu0 0.0
    %476 = vmatpush1.msra.mxu0 %v66
    %477 = vmatprep.subr.mxu0 0.0
    %478 = vmatpush1.msra.mxu0 %v67
    %479 = vmatprep.subr.mxu0 0.0
    %480 = vmatpush1.msra.mxu0 %v68
    %481 = vmatprep.subr.mxu0 0.0
    %482 = vmatpush1.msra.mxu0 %v69
    %483 = vmatprep.subr.mxu0 0.0
    %484 = vmatpush1.msra.mxu0 0.0
    %485 = vmatprep.subr.mxu0 0.0
    %486 = vmatpush1.msra.mxu0 0.0
    %487 = vmatprep.subr.mxu0 0.0
    %488 = vmatpush1.msra.mxu0 0.0
    %489 = vmatprep.subr.mxu0 0.0
    %490 = vmatpush1.msra.mxu0 0.0
    %491 = vmatprep.subr.mxu0 0.0
    %492 = vmatpush1.msra.mxu0 0.0
    %493 = vmatprep.subr.mxu0 0.0
    %494 = vmatpush1.msra.mxu0 0.0
    %495 = vmatprep.subr.mxu0 0.0
    %496 = vmatpush1.msra.mxu0 0.0
    %497 = vmatprep.subr.mxu0 0.0
    %498 = vmatpush1.msra.mxu0 0.0
    %499 = vmatprep.subr.mxu0 0.0
    %500 = vmatpush1.msra.mxu0 0.0
    %501 = vmatprep.subr.mxu0 0.0
    %502 = vmatpush1.msra.mxu0 0.0
    %503 = vmatprep.subr.mxu0 0.0
    %504 = vmatpush1.msra.mxu0 0.0
    %505 = vmatprep.subr.mxu0 0.0
    %506 = vmatpush1.msra.mxu0 0.0
    %507 = vmatprep.subr.mxu0 0.0
    %508 = vmatpush1.msra.mxu0 0.0
    %509 = vmatprep.subr.mxu0 0.0
    %510 = vmatpush1.msra.mxu0 0.0
    %511 = vmatprep.subr.mxu0 0.0
    %512 = vmatpush1.msra.mxu0 0.0
    %513 = vmatprep.subr.mxu0 0.0
    %514 = vmatpush1.msra.mxu0 0.0
    %515 = vmatprep.subr.mxu0 0.0
    %516 = vmatpush1.msra.mxu0 0.0
    %517 = vmatprep.subr.mxu0 0.0
    %518 = vmatpush1.msra.mxu0 0.0
    %519 = vmatprep.subr.mxu0 0.0
    %520 = vmatpush1.msra.mxu0 0.0
    %521 = vmatprep.subr.mxu0 0.0
    %522 = vmatpush1.msra.mxu0 0.0
    %523 = vmatprep.subr.mxu0 0.0
    %524 = vmatpush1.msra.mxu0 0.0
    %525 = vmatprep.subr.mxu0 0.0
    %526 = vmatpush1.msra.mxu0 0.0
    %527 = vmatprep.subr.mxu0 0.0
    %528 = vmatpush1.msra.mxu0 0.0
    %529 = vmatprep.subr.mxu0 0.0
    %530 = vmatpush1.msra.mxu0 0.0
    %531 = vmatprep.mubr.f32.mxu0 0.0
    %532 = vmatmul.mubr.f32.gmra.mrb[0].mxu0 %v465
    %v533 = vpop.f32.mrb[0].mxu0
    %v534 = vadd.f32 0.0, %v533
    %v535 = vpop.f32.mrb[0].mxu0
    %536 = vdwg.mxu0
    %v537 = vadd.f32 %v463, %v534
    %v538 = vtanh.pop %v537
    %539 = vst.msk [vmem:[#allocation2 + $0x18] sm:$0xff] %vm304, %v538
    %540 = vst.msk [vmem:[#allocation2 + $0x20] sm:$0xff] %vm219, %v538
    %v541 = vld [vmem:[#allocation3 + $0x20] sm:$0xff]
    %v543 = vsel %vm13, %v538, 0
    %545 = vmatprep.subr.mxu0 0.0
    %546 = vmatpush1.msra.mxu0 %v62
    %547 = vmatprep.subr.mxu0 0.0
    %548 = vmatpush1.msra.mxu0 %v63
    %549 = vmatprep.subr.mxu0 0.0
    %550 = vmatpush1.msra.mxu0 %v64
    %551 = vmatprep.subr.mxu0 0.0
    %552 = vmatpush1.msra.mxu0 %v65
    %553 = vmatprep.subr.mxu0 0.0
    %554 = vmatpush1.msra.mxu0 %v66
    %555 = vmatprep.subr.mxu0 0.0
    %556 = vmatpush1.msra.mxu0 %v67
    %557 = vmatprep.subr.mxu0 0.0
    %558 = vmatpush1.msra.mxu0 %v68
    %559 = vmatprep.subr.mxu0 0.0
    %560 = vmatpush1.msra.mxu0 %v69
    %561 = vmatprep.subr.mxu0 0.0
    %562 = vmatpush1.msra.mxu0 0.0
    %563 = vmatprep.subr.mxu0 0.0
    %564 = vmatpush1.msra.mxu0 0.0
    %565 = vmatprep.subr.mxu0 0.0
    %566 = vmatpush1.msra.mxu0 0.0
    %567 = vmatprep.subr.mxu0 0.0
    %568 = vmatpush1.msra.mxu0 0.0
    %569 = vmatprep.subr.mxu0 0.0
    %570 = vmatpush1.msra.mxu0 0.0
    %571 = vmatprep.subr.mxu0 0.0
    %572 = vmatpush1.msra.mxu0 0.0
    %573 = vmatprep.subr.mxu0 0.0
    %574 = vmatpush1.msra.mxu0 0.0
    %575 = vmatprep.subr.mxu0 0.0
    %576 = vmatpush1.msra.mxu0 0.0
    %577 = vmatprep.subr.mxu0 0.0
    %578 = vmatpush1.msra.mxu0 0.0
    %579 = vmatprep.subr.mxu0 0.0
    %580 = vmatpush1.msra.mxu0 0.0
    %581 = vmatprep.subr.mxu0 0.0
    %582 = vmatpush1.msra.mxu0 0.0
    %583 = vmatprep.subr.mxu0 0.0
    %584 = vmatpush1.msra.mxu0 0.0
    %585 = vmatprep.subr.mxu0 0.0
    %586 = vmatpush1.msra.mxu0 0.0
    %587 = vmatprep.subr.mxu0 0.0
    %588 = vmatpush1.msra.mxu0 0.0
    %589 = vmatprep.subr.mxu0 0.0
    %590 = vmatpush1.msra.mxu0 0.0
    %591 = vmatprep.subr.mxu0 0.0
    %592 = vmatpush1.msra.mxu0 0.0
    %593 = vmatprep.subr.mxu0 0.0
    %594 = vmatpush1.msra.mxu0 0.0
    %595 = vmatprep.subr.mxu0 0.0
    %596 = vmatpush1.msra.mxu0 0.0
    %597 = vmatprep.subr.mxu0 0.0
    %598 = vmatpush1.msra.mxu0 0.0
    %599 = vmatprep.subr.mxu0 0.0
    %600 = vmatpush1.msra.mxu0 0.0
    %601 = vmatprep.subr.mxu0 0.0
    %602 = vmatpush1.msra.mxu0 0.0
    %603 = vmatprep.subr.mxu0 0.0
    %604 = vmatpush1.msra.mxu0 0.0
    %605 = vmatprep.subr.mxu0 0.0
    %606 = vmatpush1.msra.mxu0 0.0
    %607 = vmatprep.subr.mxu0 0.0
    %608 = vmatpush1.msra.mxu0 0.0
    %609 = vmatprep.mubr.f32.mxu0 0.0
    %610 = vmatmul.mubr.f32.gmra.mrb[0].mxu0 %v543
    %v611 = vpop.f32.mrb[0].mxu0
    %v612 = vadd.f32 0.0, %v611
    %v613 = vpop.f32.mrb[0].mxu0
    %614 = vdwg.mxu0
    %v615 = vadd.f32 %v541, %v612
    %v616 = vtanh.pop %v615
    %617 = vst.msk [vmem:[#allocation2 + $0x20] sm:$0xff] %vm304, %v616
    %618 = vst.msk [vmem:[#allocation2 + $0x18] sm:$0xff] %vm219, %v616
    %v619 = vld [vmem:[#allocation3 + $0x28] sm:$0xff]
    %v621 = vsel %vm13, %v616, 0
    %623 = vmatprep.subr.mxu0 0.0
    %624 = vmatpush1.msra.mxu0 %v62
    %625 = vmatprep.subr.mxu0 0.0
    %626 = vmatpush1.msra.mxu0 %v63
    %627 = vmatprep.subr.mxu0 0.0
    %628 = vmatpush1.msra.mxu0 %v64
    %629 = vmatprep.subr.mxu0 0.0
    %630 = vmatpush1.msra.mxu0 %v65
    %631 = vmatprep.subr.mxu0 0.0
    %632 = vmatpush1.msra.mxu0 %v66
    %633 = vmatprep.subr.mxu0 0.0
    %634 = vmatpush1.msra.mxu0 %v67
    %635 = vmatprep.subr.mxu0 0.0
    %636 = vmatpush1.msra.mxu0 %v68
    %637 = vmatprep.subr.mxu0 0.0
    %638 = vmatpush1.msra.mxu0 %v69
    %639 = vmatprep.subr.mxu0 0.0
    %640 = vmatpush1.msra.mxu0 0.0
    %641 = vmatprep.subr.mxu0 0.0
    %642 = vmatpush1.msra.mxu0 0.0
    %643 = vmatprep.subr.mxu0 0.0
    %644 = vmatpush1.msra.mxu0 0.0
    %645 = vmatprep.subr.mxu0 0.0
    %646 = vmatpush1.msra.mxu0 0.0
    %647 = vmatprep.subr.mxu0 0.0
    %648 = vmatpush1.msra.mxu0 0.0
    %649 = vmatprep.subr.mxu0 0.0
    %650 = vmatpush1.msra.mxu0 0.0
    %651 = vmatprep.subr.mxu0 0.0
    %652 = vmatpush1.msra.mxu0 0.0
    %653 = vmatprep.subr.mxu0 0.0
    %654 = vmatpush1.msra.mxu0 0.0
    %655 = vmatprep.subr.mxu0 0.0
    %656 = vmatpush1.msra.mxu0 0.0
    %657 = vmatprep.subr.mxu0 0.0
    %658 = vmatpush1.msra.mxu0 0.0
    %659 = vmatprep.subr.mxu0 0.0
    %660 = vmatpush1.msra.mxu0 0.0
    %661 = vmatprep.subr.mxu0 0.0
    %662 = vmatpush1.msra.mxu0 0.0
    %663 = vmatprep.subr.mxu0 0.0
    %664 = vmatpush1.msra.mxu0 0.0
    %665 = vmatprep.subr.mxu0 0.0
    %666 = vmatpush1.msra.mxu0 0.0
    %667 = vmatprep.subr.mxu0 0.0
    %668 = vmatpush1.msra.mxu0 0.0
    %669 = vmatprep.subr.mxu0 0.0
    %670 = vmatpush1.msra.mxu0 0.0
    %671 = vmatprep.subr.mxu0 0.0
    %672 = vmatpush1.msra.mxu0 0.0
    %673 = vmatprep.subr.mxu0 0.0
    %674 = vmatpush1.msra.mxu0 0.0
    %675 = vmatprep.subr.mxu0 0.0
    %676 = vmatpush1.msra.mxu0 0.0
    %677 = vmatprep.subr.mxu0 0.0
    %678 = vmatpush1.msra.mxu0 0.0
    %679 = vmatprep.subr.mxu0 0.0
    %680 = vmatpush1.msra.mxu0 0.0
    %681 = vmatprep.subr.mxu0 0.0
    %682 = vmatpush1.msra.mxu0 0.0
    %683 = vmatprep.subr.mxu0 0.0
    %684 = vmatpush1.msra.mxu0 0.0
    %685 = vmatprep.subr.mxu0 0.0
    %686 = vmatpush1.msra.mxu0 0.0
    %687 = vmatprep.mubr.f32.mxu0 0.0
    %688 = vmatmul.mubr.f32.gmra.mrb[0].mxu0 %v621
    %v689 = vpop.f32.mrb[0].mxu0
    %v690 = vadd.f32 0.0, %v689
    %v691 = vpop.f32.mrb[0].mxu0
    %692 = vdwg.mxu0
    %v693 = vadd.f32 %v619, %v690
    %v694 = vtanh.pop %v693
    %695 = vst.msk [vmem:[#allocation2 + $0x28] sm:$0xff] %vm304, %v694
    %696 = vst.msk [vmem:[#allocation2 + $0x10] sm:$0xff] %vm219, %v694
    %v697 = vld [vmem:[#allocation3 + $0x30] sm:$0xff]
    %v699 = vsel %vm13, %v694, 0
    %701 = vmatprep.subr.mxu0 0.0
    %702 = vmatpush1.msra.mxu0 %v62
    %703 = vmatprep.subr.mxu0 0.0
    %704 = vmatpush1.msra.mxu0 %v63
    %705 = vmatprep.subr.mxu0 0.0
    %706 = vmatpush1.msra.mxu0 %v64
    %707 = vmatprep.subr.mxu0 0.0
    %708 = vmatpush1.msra.mxu0 %v65
    %709 = vmatprep.subr.mxu0 0.0
    %710 = vmatpush1.msra.mxu0 %v66
    %711 = vmatprep.subr.mxu0 0.0
    %712 = vmatpush1.msra.mxu0 %v67
    %713 = vmatprep.subr.mxu0 0.0
    %714 = vmatpush1.msra.mxu0 %v68
    %715 = vmatprep.subr.mxu0 0.0
    %716 = vmatpush1.msra.mxu0 %v69
    %717 = vmatprep.subr.mxu0 0.0
    %718 = vmatpush1.msra.mxu0 0.0
    %719 = vmatprep.subr.mxu0 0.0
    %720 = vmatpush1.msra.mxu0 0.0
    %721 = vmatprep.subr.mxu0 0.0
    %722 = vmatpush1.msra.mxu0 0.0
    %723 = vmatprep.subr.mxu0 0.0
    %724 = vmatpush1.msra.mxu0 0.0
    %725 = vmatprep.subr.mxu0 0.0
    %726 = vmatpush1.msra.mxu0 0.0
    %727 = vmatprep.subr.mxu0 0.0
    %728 = vmatpush1.msra.mxu0 0.0
    %729 = vmatprep.subr.mxu0 0.0
    %730 = vmatpush1.msra.mxu0 0.0
    %731 = vmatprep.subr.mxu0 0.0
    %732 = vmatpush1.msra.mxu0 0.0
    %733 = vmatprep.subr.mxu0 0.0
    %734 = vmatpush1.msra.mxu0 0.0
    %735 = vmatprep.subr.mxu0 0.0
    %736 = vmatpush1.msra.mxu0 0.0
    %737 = vmatprep.subr.mxu0 0.0
    %738 = vmatpush1.msra.mxu0 0.0
    %739 = vmatprep.subr.mxu0 0.0
    %740 = vmatpush1.msra.mxu0 0.0
    %741 = vmatprep.subr.mxu0 0.0
    %742 = vmatpush1.msra.mxu0 0.0
    %743 = vmatprep.subr.mxu0 0.0
    %744 = vmatpush1.msra.mxu0 0.0
    %745 = vmatprep.subr.mxu0 0.0
    %746 = vmatpush1.msra.mxu0 0.0
    %747 = vmatprep.subr.mxu0 0.0
    %748 = vmatpush1.msra.mxu0 0.0
    %749 = vmatprep.subr.mxu0 0.0
    %750 = vmatpush1.msra.mxu0 0.0
    %751 = vmatprep.subr.mxu0 0.0
    %752 = vmatpush1.msra.mxu0 0.0
    %753 = vmatprep.subr.mxu0 0.0
    %754 = vmatpush1.msra.mxu0 0.0
    %755 = vmatprep.subr.mxu0 0.0
    %756 = vmatpush1.msra.mxu0 0.0
    %757 = vmatprep.subr.mxu0 0.0
    %758 = vmatpush1.msra.mxu0 0.0
    %759 = vmatprep.subr.mxu0 0.0
    %760 = vmatpush1.msra.mxu0 0.0
    %761 = vmatprep.subr.mxu0 0.0
    %762 = vmatpush1.msra.mxu0 0.0
    %763 = vmatprep.subr.mxu0 0.0
    %764 = vmatpush1.msra.mxu0 0.0
    %765 = vmatprep.mubr.f32.mxu0 0.0
    %766 = vmatmul.mubr.f32.gmra.mrb[0].mxu0 %v699
    %v767 = vpop.f32.mrb[0].mxu0
    %v768 = vadd.f32 0.0, %v767
    %v769 = vpop.f32.mrb[0].mxu0
    %770 = vdwg.mxu0
    %v771 = vadd.f32 %v697, %v768
    %v772 = vtanh.pop %v771
    %773 = vst.msk [vmem:[#allocation2 + $0x30] sm:$0xff] %vm304, %v772
    %774 = vst.msk [vmem:[#allocation2 + $0x8] sm:$0xff] %vm219, %v772
    %v775 = vld [vmem:[#allocation3 + $0x38] sm:$0xff]
    %v777 = vsel %vm13, %v772, 0
    %779 = vmatprep.subr.mxu0 0.0
    %780 = vmatpush1.msra.mxu0 %v62
    %781 = vmatprep.subr.mxu0 0.0
    %782 = vmatpush1.msra.mxu0 %v63
    %783 = vmatprep.subr.mxu0 0.0
    %784 = vmatpush1.msra.mxu0 %v64
    %785 = vmatprep.subr.mxu0 0.0
    %786 = vmatpush1.msra.mxu0 %v65
    %787 = vmatprep.subr.mxu0 0.0
    %788 = vmatpush1.msra.mxu0 %v66
    %789 = vmatprep.subr.mxu0 0.0
    %790 = vmatpush1.msra.mxu0 %v67
    %791 = vmatprep.subr.mxu0 0.0
    %792 = vmatpush1.msra.mxu0 %v68
    %793 = vmatprep.subr.mxu0 0.0
    %794 = vmatpush1.msra.mxu0 %v69
    %795 = vmatprep.subr.mxu0 0.0
    %796 = vmatpush1.msra.mxu0 0.0
    %797 = vmatprep.subr.mxu0 0.0
    %798 = vmatpush1.msra.mxu0 0.0
    %799 = vmatprep.subr.mxu0 0.0
    %800 = vmatpush1.msra.mxu0 0.0
    %801 = vmatprep.subr.mxu0 0.0
    %802 = vmatpush1.msra.mxu0 0.0
    %803 = vmatprep.subr.mxu0 0.0
    %804 = vmatpush1.msra.mxu0 0.0
    %805 = vmatprep.subr.mxu0 0.0
    %806 = vmatpush1.msra.mxu0 0.0
    %807 = vmatprep.subr.mxu0 0.0
    %808 = vmatpush1.msra.mxu0 0.0
    %809 = vmatprep.subr.mxu0 0.0
    %810 = vmatpush1.msra.mxu0 0.0
    %811 = vmatprep.subr.mxu0 0.0
    %812 = vmatpush1.msra.mxu0 0.0
    %813 = vmatprep.subr.mxu0 0.0
    %814 = vmatpush1.msra.mxu0 0.0
    %815 = vmatprep.subr.mxu0 0.0
    %816 = vmatpush1.msra.mxu0 0.0
    %817 = vmatprep.subr.mxu0 0.0
    %818 = vmatpush1.msra.mxu0 0.0
    %819 = vmatprep.subr.mxu0 0.0
    %820 = vmatpush1.msra.mxu0 0.0
    %821 = vmatprep.subr.mxu0 0.0
    %822 = vmatpush1.msra.mxu0 0.0
    %823 = vmatprep.subr.mxu0 0.0
    %824 = vmatpush1.msra.mxu0 0.0
    %825 = vmatprep.subr.mxu0 0.0
    %826 = vmatpush1.msra.mxu0 0.0
    %827 = vmatprep.subr.mxu0 0.0
    %828 = vmatpush1.msra.mxu0 0.0
    %829 = vmatprep.subr.mxu0 0.0
    %830 = vmatpush1.msra.mxu0 0.0
    %831 = vmatprep.subr.mxu0 0.0
    %832 = vmatpush1.msra.mxu0 0.0
    %833 = vmatprep.subr.mxu0 0.0
    %834 = vmatpush1.msra.mxu0 0.0
    %835 = vmatprep.subr.mxu0 0.0
    %836 = vmatpush1.msra.mxu0 0.0
    %837 = vmatprep.subr.mxu0 0.0
    %838 = vmatpush1.msra.mxu0 0.0
    %839 = vmatprep.subr.mxu0 0.0
    %840 = vmatpush1.msra.mxu0 0.0
    %841 = vmatprep.subr.mxu0 0.0
    %842 = vmatpush1.msra.mxu0 0.0
    %843 = vmatprep.mubr.f32.mxu0 0.0
    %844 = vmatmul.mubr.f32.gmra.mrb[0].mxu0 %v777
    %v845 = vpop.f32.mrb[0].mxu0
    %v846 = vadd.f32 0.0, %v845
    %v847 = vpop.f32.mrb[0].mxu0
    %848 = vdwg.mxu0
    %v849 = vadd.f32 %v775, %v846
    %v850 = vtanh.pop %v849
    %851 = vst.msk [vmem:[#allocation2 + $0x38] sm:$0xff] %vm304, %v850
    %852 = vst.msk [vmem:[#allocation2] sm:$0xff] %vm219, %v850
    %v853 = vld [vmem:[%s1 + $0x88] sm:$0xff]
    %v854 = vld [vmem:[%s1 + $0x90] sm:$0xff]
    %v855 = vld [vmem:[%s1 + $0x98] sm:$0xff]
    %v856 = vld [vmem:[%s1 + $0xa0] sm:$0xff]
    %v857 = vld [vmem:[%s1 + $0xa8] sm:$0xff]
    %v858 = vld [vmem:[%s1 + $0xb0] sm:$0xff]
    %v859 = vld [vmem:[%s1 + $0xb8] sm:$0xff]
    %v860 = vld [vmem:[%s1 + $0xc0] sm:$0xff]
    %v861 = vld [vmem:[%s1 + $0xc8] sm:$0x1]
    %v862 = vld [vmem:[%s1 + $0xd0] sm:$0xff]
    %v863 = vld [vmem:[%s1 + $0xd8] sm:$0xff]
    %v864 = vld [vmem:[%s1 + $0xe0] sm:$0xff]
    %v865 = vld [vmem:[%s1 + $0xe8] sm:$0xff]
    %v866 = vld [vmem:[%s1 + $0xf0] sm:$0xff]
    %v867 = vld [vmem:[%s1 + $0xf8] sm:$0xff]
    %v868 = vld [vmem:[%s1 + $0x100] sm:$0xff]
    %v869 = vld [vmem:[%s1 + $0x108] sm:$0xff]
    %v870 = vld [vmem:[#allocation2] sm:$0xff]
    %v871 = vld [vmem:[#allocation2 + $0x8] sm:$0xff]
    %v872 = vld [vmem:[#allocation2 + $0x10] sm:$0xff]
    %v873 = vld [vmem:[#allocation2 + $0x18] sm:$0xff]
    %v874 = vld [vmem:[#allocation2 + $0x20] sm:$0xff]
    %v875 = vld [vmem:[#allocation2 + $0x28] sm:$0xff]
    %v876 = vld [vmem:[#allocation2 + $0x30] sm:$0xff]
    %v877 = vld [vmem:[#allocation2 + $0x38] sm:$0xff]
    %v878 = vlaneseq
    %v879 = vshrl.u32 %v878, 7
    %v880 = vsub.s32 0, %v879
    %v881 = vrot.slane %v861, %v880
    %v883 = vsel %vm13, %v870, 0
    %v886 = vsel %vm13, %v871, 0
    %v889 = vsel %vm13, %v872, 0
    %v892 = vsel %vm13, %v873, 0
    %v895 = vsel %vm13, %v874, 0
    %v898 = vsel %vm13, %v875, 0
    %v901 = vsel %vm13, %v876, 0
    %v904 = vsel %vm13, %v877, 0
    %906 = vmatprep.subr.mxu0 0.0
    %907 = vmatpush1.msra.mxu0 %v853
    %908 = vmatprep.subr.mxu0 0.0
    %909 = vmatpush1.msra.mxu0 %v854
    %910 = vmatprep.subr.mxu0 0.0
    %911 = vmatpush1.msra.mxu0 %v855
    %912 = vmatprep.subr.mxu0 0.0
    %913 = vmatpush1.msra.mxu0 %v856
    %914 = vmatprep.subr.mxu0 0.0
    %915 = vmatpush1.msra.mxu0 %v857
    %916 = vmatprep.subr.mxu0 0.0
    %917 = vmatpush1.msra.mxu0 %v858
    %918 = vmatprep.subr.mxu0 0.0
    %919 = vmatpush1.msra.mxu0 %v859
    %920 = vmatprep.subr.mxu0 0.0
    %921 = vmatpush1.msra.mxu0 %v860
    %922 = vmatprep.subr.mxu0 0.0
    %923 = vmatpush1.msra.mxu0 0.0
    %924 = vmatprep.subr.mxu0 0.0
    %925 = vmatpush1.msra.mxu0 0.0
    %926 = vmatprep.subr.mxu0 0.0
    %927 = vmatpush1.msra.mxu0 0.0
    %928 = vmatprep.subr.mxu0 0.0
    %929 = vmatpush1.msra.mxu0 0.0
    %930 = vmatprep.subr.mxu0 0.0
    %931 = vmatpush1.msra.mxu0 0.0
    %932 = vmatprep.subr.mxu0 0.0
    %933 = vmatpush1.msra.mxu0 0.0
    %934 = vmatprep.subr.mxu0 0.0
    %935 = vmatpush1.msra.mxu0 0.0
    %936 = vmatprep.subr.mxu0 0.0
    %937 = vmatpush1.msra.mxu0 0.0
    %938 = vmatprep.subr.mxu0 0.0
    %939 = vmatpush1.msra.mxu0 0.0
    %940 = vmatprep.subr.mxu0 0.0
    %941 = vmatpush1.msra.mxu0 0.0
    %942 = vmatprep.subr.mxu0 0.0
    %943 = vmatpush1.msra.mxu0 0.0
    %944 = vmatprep.subr.mxu0 0.0
    %945 = vmatpush1.msra.mxu0 0.0
    %946 = vmatprep.subr.mxu0 0.0
    %947 = vmatpush1.msra.mxu0 0.0
    %948 = vmatprep.subr.mxu0 0.0
    %949 = vmatpush1.msra.mxu0 0.0
    %950 = vmatprep.subr.mxu0 0.0
    %951 = vmatpush1.msra.mxu0 0.0
    %952 = vmatprep.subr.mxu0 0.0
    %953 = vmatpush1.msra.mxu0 0.0
    %954 = vmatprep.subr.mxu0 0.0
    %955 = vmatpush1.msra.mxu0 0.0
    %956 = vmatprep.subr.mxu0 0.0
    %957 = vmatpush1.msra.mxu0 0.0
    %958 = vmatprep.subr.mxu0 0.0
    %959 = vmatpush1.msra.mxu0 0.0
    %960 = vmatprep.subr.mxu0 0.0
    %961 = vmatpush1.msra.mxu0 0.0
    %962 = vmatprep.subr.mxu0 0.0
    %963 = vmatpush1.msra.mxu0 0.0
    %964 = vmatprep.subr.mxu0 0.0
    %965 = vmatpush1.msra.mxu0 0.0
    %966 = vmatprep.subr.mxu0 0.0
    %967 = vmatpush1.msra.mxu0 0.0
    %968 = vmatprep.subr.mxu0 0.0
    %969 = vmatpush1.msra.mxu0 0.0
    %970 = vmatprep.mubr.f32.mxu0 0.0
    %971 = vmatmul.mubr.f32.gmra.mrb[0].mxu0 %v883
    %v972 = vpop.f32.mrb[0].mxu0
    %v973 = vadd.f32 %v881, %v972
    %v974 = vpop.f32.mrb[0].mxu0
    %975 = vmatprep.mubr.f32.mxu0 0.0
    %976 = vmatmul.mubr.f32.gmra.mrb[0].mxu0 %v886
    %v977 = vpop.f32.mrb[0].mxu0
    %v978 = vadd.f32 %v881, %v977
    %v979 = vpop.f32.mrb[0].mxu0
    %980 = vmatprep.mubr.f32.mxu0 0.0
    %981 = vmatmul.mubr.f32.gmra.mrb[0].mxu0 %v889
    %v982 = vpop.f32.mrb[0].mxu0
    %v983 = vadd.f32 %v881, %v982
    %v984 = vpop.f32.mrb[0].mxu0
    %985 = vmatprep.mubr.f32.mxu0 0.0
    %986 = vmatmul.mubr.f32.gmra.mrb[0].mxu0 %v892
    %v987 = vpop.f32.mrb[0].mxu0
    %v988 = vadd.f32 %v881, %v987
    %v989 = vpop.f32.mrb[0].mxu0
    %990 = vmatprep.mubr.f32.mxu0 0.0
    %991 = vmatmul.mubr.f32.gmra.mrb[0].mxu0 %v895
    %v992 = vpop.f32.mrb[0].mxu0
    %v993 = vadd.f32 %v881, %v992
    %v994 = vpop.f32.mrb[0].mxu0
    %995 = vmatprep.mubr.f32.mxu0 0.0
    %996 = vmatmul.mubr.f32.gmra.mrb[0].mxu0 %v898
    %v997 = vpop.f32.mrb[0].mxu0
    %v998 = vadd.f32 %v881, %v997
    %v999 = vpop.f32.mrb[0].mxu0
    %1000 = vmatprep.mubr.f32.mxu0 0.0
    %1001 = vmatmul.mubr.f32.gmra.mrb[0].mxu0 %v901
    %v1002 = vpop.f32.mrb[0].mxu0
    %v1003 = vadd.f32 %v881, %v1002
    %v1004 = vpop.f32.mrb[0].mxu0
    %1005 = vmatprep.mubr.f32.mxu0 0.0
    %1006 = vmatmul.mubr.f32.gmra.mrb[0].mxu0 %v904
    %v1007 = vpop.f32.mrb[0].mxu0
    %v1008 = vadd.f32 %v881, %v1007
    %v1009 = vpop.f32.mrb[0].mxu0
    %1010 = vdwg.mxu0
    %1011 = vst.msk [vmem:[#allocation3] sm:$0xff] %vm13, %v973
    %1012 = vst.msk [vmem:[#allocation3 + $0x8] sm:$0xff] %vm13, %v978
    %1013 = vst.msk [vmem:[#allocation3 + $0x10] sm:$0xff] %vm13, %v983
    %1014 = vst.msk [vmem:[#allocation3 + $0x18] sm:$0xff] %vm13, %v988
    %1015 = vst.msk [vmem:[#allocation3 + $0x20] sm:$0xff] %vm13, %v993
    %1016 = vst.msk [vmem:[#allocation3 + $0x28] sm:$0xff] %vm13, %v998
    %1017 = vst.msk [vmem:[#allocation3 + $0x30] sm:$0xff] %vm13, %v1003
    %1018 = vst.msk [vmem:[#allocation3 + $0x38] sm:$0xff] %vm13, %v1008
    %1019 = vst.msk [vmem:[#allocation3] sm:$0xff] %vm219, %v1008
    %1020 = vst.msk [vmem:[#allocation3 + $0x8] sm:$0xff] %vm219, %v1003
    %1021 = vst.msk [vmem:[#allocation3 + $0x10] sm:$0xff] %vm219, %v998
    %1022 = vst.msk [vmem:[#allocation3 + $0x18] sm:$0xff] %vm219, %v993
    %1023 = vst.msk [vmem:[#allocation3 + $0x20] sm:$0xff] %vm219, %v988
    %1024 = vst.msk [vmem:[#allocation3 + $0x28] sm:$0xff] %vm219, %v983
    %1025 = vst.msk [vmem:[#allocation3 + $0x30] sm:$0xff] %vm219, %v978
    %1026 = vst.msk [vmem:[#allocation3 + $0x38] sm:$0xff] %vm219, %v973
    %v1027 = vld [vmem:[#allocation3] sm:$0xff]
    %1028 = vmatprep.subr.mxu0 0.0
    %1029 = vmatpush1.msra.mxu0 %v862
    %1030 = vmatprep.subr.mxu0 0.0
    %1031 = vmatpush1.msra.mxu0 %v863
    %1032 = vmatprep.subr.mxu0 0.0
    %1033 = vmatpush1.msra.mxu0 %v864
    %1034 = vmatprep.subr.mxu0 0.0
    %1035 = vmatpush1.msra.mxu0 %v865
    %1036 = vmatprep.subr.mxu0 0.0
    %1037 = vmatpush1.msra.mxu0 %v866
    %1038 = vmatprep.subr.mxu0 0.0
    %1039 = vmatpush1.msra.mxu0 %v867
    %1040 = vmatprep.subr.mxu0 0.0
    %1041 = vmatpush1.msra.mxu0 %v868
    %1042 = vmatprep.subr.mxu0 0.0
    %1043 = vmatpush1.msra.mxu0 %v869
    %1044 = vmatprep.subr.mxu0 0.0
    %1045 = vmatpush1.msra.mxu0 0.0
    %1046 = vmatprep.subr.mxu0 0.0
    %1047 = vmatpush1.msra.mxu0 0.0
    %1048 = vmatprep.subr.mxu0 0.0
    %1049 = vmatpush1.msra.mxu0 0.0
    %1050 = vmatprep.subr.mxu0 0.0
    %1051 = vmatpush1.msra.mxu0 0.0
    %1052 = vmatprep.subr.mxu0 0.0
    %1053 = vmatpush1.msra.mxu0 0.0
    %1054 = vmatprep.subr.mxu0 0.0
    %1055 = vmatpush1.msra.mxu0 0.0
    %1056 = vmatprep.subr.mxu0 0.0
    %1057 = vmatpush1.msra.mxu0 0.0
    %1058 = vmatprep.subr.mxu0 0.0
    %1059 = vmatpush1.msra.mxu0 0.0
    %1060 = vmatprep.subr.mxu0 0.0
    %1061 = vmatpush1.msra.mxu0 0.0
    %1062 = vmatprep.subr.mxu0 0.0
    %1063 = vmatpush1.msra.mxu0 0.0
    %1064 = vmatprep.subr.mxu0 0.0
    %1065 = vmatpush1.msra.mxu0 0.0
    %1066 = vmatprep.subr.mxu0 0.0
    %1067 = vmatpush1.msra.mxu0 0.0
    %1068 = vmatprep.subr.mxu0 0.0
    %1069 = vmatpush1.msra.mxu0 0.0
    %1070 = vmatprep.subr.mxu0 0.0
    %1071 = vmatpush1.msra.mxu0 0.0
    %1072 = vmatprep.subr.mxu0 0.0
    %1073 = vmatpush1.msra.mxu0 0.0
    %1074 = vmatprep.subr.mxu0 0.0
    %1075 = vmatpush1.msra.mxu0 0.0
    %1076 = vmatprep.subr.mxu0 0.0
    %1077 = vmatpush1.msra.mxu0 0.0
    %1078 = vmatprep.subr.mxu0 0.0
    %1079 = vmatpush1.msra.mxu0 0.0
    %1080 = vmatprep.subr.mxu0 0.0
    %1081 = vmatpush1.msra.mxu0 0.0
    %1082 = vmatprep.subr.mxu0 0.0
    %1083 = vmatpush1.msra.mxu0 0.0
    %1084 = vmatprep.subr.mxu0 0.0
    %1085 = vmatpush1.msra.mxu0 0.0
    %1086 = vmatprep.subr.mxu0 0.0
    %1087 = vmatpush1.msra.mxu0 0.0
    %1088 = vmatprep.subr.mxu0 0.0
    %1089 = vmatpush1.msra.mxu0 0.0
    %1090 = vmatprep.subr.mxu0 0.0
    %1091 = vmatpush1.msra.mxu0 0.0
    %1092 = vmatprep.mubr.f32.mxu0 0.0
    %1093 = vmatmul.mubr.f32.gmra.mrb[0].mxu0 %v230
    %v1094 = vpop.f32.mrb[0].mxu0
    %v1095 = vadd.f32 0.0, %v1094
    %v1096 = vpop.f32.mrb[0].mxu0
    %1097 = vdwg.mxu0
    %v1098 = vadd.f32 %v1027, %v1095
    %v1099 = vtanh.pop %v1098
    %v1100 = vld [vmem:[#allocation3 + $0x8] sm:$0xff]
    %v1102 = vsel %vm13, %v1099, 0
    %1104 = vmatprep.subr.mxu0 0.0
    %1105 = vmatpush1.msra.mxu0 %v862
    %1106 = vmatprep.subr.mxu0 0.0
    %1107 = vmatpush1.msra.mxu0 %v863
    %1108 = vmatprep.subr.mxu0 0.0
    %1109 = vmatpush1.msra.mxu0 %v864
    %1110 = vmatprep.subr.mxu0 0.0
    %1111 = vmatpush1.msra.mxu0 %v865
    %1112 = vmatprep.subr.mxu0 0.0
    %1113 = vmatpush1.msra.mxu0 %v866
    %1114 = vmatprep.subr.mxu0 0.0
    %1115 = vmatpush1.msra.mxu0 %v867
    %1116 = vmatprep.subr.mxu0 0.0
    %1117 = vmatpush1.msra.mxu0 %v868
    %1118 = vmatprep.subr.mxu0 0.0
    %1119 = vmatpush1.msra.mxu0 %v869
    %1120 = vmatprep.subr.mxu0 0.0
    %1121 = vmatpush1.msra.mxu0 0.0
    %1122 = vmatprep.subr.mxu0 0.0
    %1123 = vmatpush1.msra.mxu0 0.0
    %1124 = vmatprep.subr.mxu0 0.0
    %1125 = vmatpush1.msra.mxu0 0.0
    %1126 = vmatprep.subr.mxu0 0.0
    %1127 = vmatpush1.msra.mxu0 0.0
    %1128 = vmatprep.subr.mxu0 0.0
    %1129 = vmatpush1.msra.mxu0 0.0
    %1130 = vmatprep.subr.mxu0 0.0
    %1131 = vmatpush1.msra.mxu0 0.0
    %1132 = vmatprep.subr.mxu0 0.0
    %1133 = vmatpush1.msra.mxu0 0.0
    %1134 = vmatprep.subr.mxu0 0.0
    %1135 = vmatpush1.msra.mxu0 0.0
    %1136 = vmatprep.subr.mxu0 0.0
    %1137 = vmatpush1.msra.mxu0 0.0
    %1138 = vmatprep.subr.mxu0 0.0
    %1139 = vmatpush1.msra.mxu0 0.0
    %1140 = vmatprep.subr.mxu0 0.0
    %1141 = vmatpush1.msra.mxu0 0.0
    %1142 = vmatprep.subr.mxu0 0.0
    %1143 = vmatpush1.msra.mxu0 0.0
    %1144 = vmatprep.subr.mxu0 0.0
    %1145 = vmatpush1.msra.mxu0 0.0
    %1146 = vmatprep.subr.mxu0 0.0
    %1147 = vmatpush1.msra.mxu0 0.0
    %1148 = vmatprep.subr.mxu0 0.0
    %1149 = vmatpush1.msra.mxu0 0.0
    %1150 = vmatprep.subr.mxu0 0.0
    %1151 = vmatpush1.msra.mxu0 0.0
    %1152 = vmatprep.subr.mxu0 0.0
    %1153 = vmatpush1.msra.mxu0 0.0
    %1154 = vmatprep.subr.mxu0 0.0
    %1155 = vmatpush1.msra.mxu0 0.0
    %1156 = vmatprep.subr.mxu0 0.0
    %1157 = vmatpush1.msra.mxu0 0.0
    %1158 = vmatprep.subr.mxu0 0.0
    %1159 = vmatpush1.msra.mxu0 0.0
    %1160 = vmatprep.subr.mxu0 0.0
    %1161 = vmatpush1.msra.mxu0 0.0
    %1162 = vmatprep.subr.mxu0 0.0
    %1163 = vmatpush1.msra.mxu0 0.0
    %1164 = vmatprep.subr.mxu0 0.0
    %1165 = vmatpush1.msra.mxu0 0.0
    %1166 = vmatprep.subr.mxu0 0.0
    %1167 = vmatpush1.msra.mxu0 0.0
    %1168 = vmatprep.mubr.f32.mxu0 0.0
    %1169 = vmatmul.mubr.f32.gmra.mrb[0].mxu0 %v1102
    %v1170 = vpop.f32.mrb[0].mxu0
    %v1171 = vadd.f32 0.0, %v1170
    %v1172 = vpop.f32.mrb[0].mxu0
    %1173 = vdwg.mxu0
    %v1174 = vadd.f32 %v1100, %v1171
    %v1175 = vtanh.pop %v1174
    %v1176 = vld [vmem:[#allocation3 + $0x10] sm:$0xff]
    %v1178 = vsel %vm13, %v1175, 0
    %1180 = vmatprep.subr.mxu0 0.0
    %1181 = vmatpush1.msra.mxu0 %v862
    %1182 = vmatprep.subr.mxu0 0.0
    %1183 = vmatpush1.msra.mxu0 %v863
    %1184 = vmatprep.subr.mxu0 0.0
    %1185 = vmatpush1.msra.mxu0 %v864
    %1186 = vmatprep.subr.mxu0 0.0
    %1187 = vmatpush1.msra.mxu0 %v865
    %1188 = vmatprep.subr.mxu0 0.0
    %1189 = vmatpush1.msra.mxu0 %v866
    %1190 = vmatprep.subr.mxu0 0.0
    %1191 = vmatpush1.msra.mxu0 %v867
    %1192 = vmatprep.subr.mxu0 0.0
    %1193 = vmatpush1.msra.mxu0 %v868
    %1194 = vmatprep.subr.mxu0 0.0
    %1195 = vmatpush1.msra.mxu0 %v869
    %1196 = vmatprep.subr.mxu0 0.0
    %1197 = vmatpush1.msra.mxu0 0.0
    %1198 = vmatprep.subr.mxu0 0.0
    %1199 = vmatpush1.msra.mxu0 0.0
    %1200 = vmatprep.subr.mxu0 0.0
    %1201 = vmatpush1.msra.mxu0 0.0
    %1202 = vmatprep.subr.mxu0 0.0
    %1203 = vmatpush1.msra.mxu0 0.0
    %1204 = vmatprep.subr.mxu0 0.0
    %1205 = vmatpush1.msra.mxu0 0.0
    %1206 = vmatprep.subr.mxu0 0.0
    %1207 = vmatpush1.msra.mxu0 0.0
    %1208 = vmatprep.subr.mxu0 0.0
    %1209 = vmatpush1.msra.mxu0 0.0
    %1210 = vmatprep.subr.mxu0 0.0
    %1211 = vmatpush1.msra.mxu0 0.0
    %1212 = vmatprep.subr.mxu0 0.0
    %1213 = vmatpush1.msra.mxu0 0.0
    %1214 = vmatprep.subr.mxu0 0.0
    %1215 = vmatpush1.msra.mxu0 0.0
    %1216 = vmatprep.subr.mxu0 0.0
    %1217 = vmatpush1.msra.mxu0 0.0
    %1218 = vmatprep.subr.mxu0 0.0
    %1219 = vmatpush1.msra.mxu0 0.0
    %1220 = vmatprep.subr.mxu0 0.0
    %1221 = vmatpush1.msra.mxu0 0.0
    %1222 = vmatprep.subr.mxu0 0.0
    %1223 = vmatpush1.msra.mxu0 0.0
    %1224 = vmatprep.subr.mxu0 0.0
    %1225 = vmatpush1.msra.mxu0 0.0
    %1226 = vmatprep.subr.mxu0 0.0
    %1227 = vmatpush1.msra.mxu0 0.0
    %1228 = vmatprep.subr.mxu0 0.0
    %1229 = vmatpush1.msra.mxu0 0.0
    %1230 = vmatprep.subr.mxu0 0.0
    %1231 = vmatpush1.msra.mxu0 0.0
    %1232 = vmatprep.subr.mxu0 0.0
    %1233 = vmatpush1.msra.mxu0 0.0
    %1234 = vmatprep.subr.mxu0 0.0
    %1235 = vmatpush1.msra.mxu0 0.0
    %1236 = vmatprep.subr.mxu0 0.0
    %1237 = vmatpush1.msra.mxu0 0.0
    %1238 = vmatprep.subr.mxu0 0.0
    %1239 = vmatpush1.msra.mxu0 0.0
    %1240 = vmatprep.subr.mxu0 0.0
    %1241 = vmatpush1.msra.mxu0 0.0
    %1242 = vmatprep.subr.mxu0 0.0
    %1243 = vmatpush1.msra.mxu0 0.0
    %1244 = vmatprep.mubr.f32.mxu0 0.0
    %1245 = vmatmul.mubr.f32.gmra.mrb[0].mxu0 %v1178
    %v1246 = vpop.f32.mrb[0].mxu0
    %v1247 = vadd.f32 0.0, %v1246
    %v1248 = vpop.f32.mrb[0].mxu0
    %1249 = vdwg.mxu0
    %v1250 = vadd.f32 %v1176, %v1247
    %v1251 = vtanh.pop %v1250
    %v1252 = vld [vmem:[#allocation3 + $0x18] sm:$0xff]
    %v1254 = vsel %vm13, %v1251, 0
    %1256 = vmatprep.subr.mxu0 0.0
    %1257 = vmatpush1.msra.mxu0 %v862
    %1258 = vmatprep.subr.mxu0 0.0
    %1259 = vmatpush1.msra.mxu0 %v863
    %1260 = vmatprep.subr.mxu0 0.0
    %1261 = vmatpush1.msra.mxu0 %v864
    %1262 = vmatprep.subr.mxu0 0.0
    %1263 = vmatpush1.msra.mxu0 %v865
    %1264 = vmatprep.subr.mxu0 0.0
    %1265 = vmatpush1.msra.mxu0 %v866
    %1266 = vmatprep.subr.mxu0 0.0
    %1267 = vmatpush1.msra.mxu0 %v867
    %1268 = vmatprep.subr.mxu0 0.0
    %1269 = vmatpush1.msra.mxu0 %v868
    %1270 = vmatprep.subr.mxu0 0.0
    %1271 = vmatpush1.msra.mxu0 %v869
    %1272 = vmatprep.subr.mxu0 0.0
    %1273 = vmatpush1.msra.mxu0 0.0
    %1274 = vmatprep.subr.mxu0 0.0
    %1275 = vmatpush1.msra.mxu0 0.0
    %1276 = vmatprep.subr.mxu0 0.0
    %1277 = vmatpush1.msra.mxu0 0.0
    %1278 = vmatprep.subr.mxu0 0.0
    %1279 = vmatpush1.msra.mxu0 0.0
    %1280 = vmatprep.subr.mxu0 0.0
    %1281 = vmatpush1.msra.mxu0 0.0
    %1282 = vmatprep.subr.mxu0 0.0
    %1283 = vmatpush1.msra.mxu0 0.0
    %1284 = vmatprep.subr.mxu0 0.0
    %1285 = vmatpush1.msra.mxu0 0.0
    %1286 = vmatprep.subr.mxu0 0.0
    %1287 = vmatpush1.msra.mxu0 0.0
    %1288 = vmatprep.subr.mxu0 0.0
    %1289 = vmatpush1.msra.mxu0 0.0
    %1290 = vmatprep.subr.mxu0 0.0
    %1291 = vmatpush1.msra.mxu0 0.0
    %1292 = vmatprep.subr.mxu0 0.0
    %1293 = vmatpush1.msra.mxu0 0.0
    %1294 = vmatprep.subr.mxu0 0.0
    %1295 = vmatpush1.msra.mxu0 0.0
    %1296 = vmatprep.subr.mxu0 0.0
    %1297 = vmatpush1.msra.mxu0 0.0
    %1298 = vmatprep.subr.mxu0 0.0
    %1299 = vmatpush1.msra.mxu0 0.0
    %1300 = vmatprep.subr.mxu0 0.0
    %1301 = vmatpush1.msra.mxu0 0.0
    %1302 = vmatprep.subr.mxu0 0.0
    %1303 = vmatpush1.msra.mxu0 0.0
    %1304 = vmatprep.subr.mxu0 0.0
    %1305 = vmatpush1.msra.mxu0 0.0
    %1306 = vmatprep.subr.mxu0 0.0
    %1307 = vmatpush1.msra.mxu0 0.0
    %1308 = vmatprep.subr.mxu0 0.0
    %1309 = vmatpush1.msra.mxu0 0.0
    %1310 = vmatprep.subr.mxu0 0.0
    %1311 = vmatpush1.msra.mxu0 0.0
    %1312 = vmatprep.subr.mxu0 0.0
    %1313 = vmatpush1.msra.mxu0 0.0
    %1314 = vmatprep.subr.mxu0 0.0
    %1315 = vmatpush1.msra.mxu0 0.0
    %1316 = vmatprep.subr.mxu0 0.0
    %1317 = vmatpush1.msra.mxu0 0.0
    %1318 = vmatprep.subr.mxu0 0.0
    %1319 = vmatpush1.msra.mxu0 0.0
    %1320 = vmatprep.mubr.f32.mxu0 0.0
    %1321 = vmatmul.mubr.f32.gmra.mrb[0].mxu0 %v1254
    %v1322 = vpop.f32.mrb[0].mxu0
    %v1323 = vadd.f32 0.0, %v1322
    %v1324 = vpop.f32.mrb[0].mxu0
    %1325 = vdwg.mxu0
    %v1326 = vadd.f32 %v1252, %v1323
    %v1327 = vtanh.pop %v1326
    %v1328 = vld [vmem:[#allocation3 + $0x20] sm:$0xff]
    %v1330 = vsel %vm13, %v1327, 0
    %1332 = vmatprep.subr.mxu0 0.0
    %1333 = vmatpush1.msra.mxu0 %v862
    %1334 = vmatprep.subr.mxu0 0.0
    %1335 = vmatpush1.msra.mxu0 %v863
    %1336 = vmatprep.subr.mxu0 0.0
    %1337 = vmatpush1.msra.mxu0 %v864
    %1338 = vmatprep.subr.mxu0 0.0
    %1339 = vmatpush1.msra.mxu0 %v865
    %1340 = vmatprep.subr.mxu0 0.0
    %1341 = vmatpush1.msra.mxu0 %v866
    %1342 = vmatprep.subr.mxu0 0.0
    %1343 = vmatpush1.msra.mxu0 %v867
    %1344 = vmatprep.subr.mxu0 0.0
    %1345 = vmatpush1.msra.mxu0 %v868
    %1346 = vmatprep.subr.mxu0 0.0
    %1347 = vmatpush1.msra.mxu0 %v869
    %1348 = vmatprep.subr.mxu0 0.0
    %1349 = vmatpush1.msra.mxu0 0.0
    %1350 = vmatprep.subr.mxu0 0.0
    %1351 = vmatpush1.msra.mxu0 0.0
    %1352 = vmatprep.subr.mxu0 0.0
    %1353 = vmatpush1.msra.mxu0 0.0
    %1354 = vmatprep.subr.mxu0 0.0
    %1355 = vmatpush1.msra.mxu0 0.0
    %1356 = vmatprep.subr.mxu0 0.0
    %1357 = vmatpush1.msra.mxu0 0.0
    %1358 = vmatprep.subr.mxu0 0.0
    %1359 = vmatpush1.msra.mxu0 0.0
    %1360 = vmatprep.subr.mxu0 0.0
    %1361 = vmatpush1.msra.mxu0 0.0
    %1362 = vmatprep.subr.mxu0 0.0
    %1363 = vmatpush1.msra.mxu0 0.0
    %1364 = vmatprep.subr.mxu0 0.0
    %1365 = vmatpush1.msra.mxu0 0.0
    %1366 = vmatprep.subr.mxu0 0.0
    %1367 = vmatpush1.msra.mxu0 0.0
    %1368 = vmatprep.subr.mxu0 0.0
    %1369 = vmatpush1.msra.mxu0 0.0
    %1370 = vmatprep.subr.mxu0 0.0
    %1371 = vmatpush1.msra.mxu0 0.0
    %1372 = vmatprep.subr.mxu0 0.0
    %1373 = vmatpush1.msra.mxu0 0.0
    %1374 = vmatprep.subr.mxu0 0.0
    %1375 = vmatpush1.msra.mxu0 0.0
    %1376 = vmatprep.subr.mxu0 0.0
    %1377 = vmatpush1.msra.mxu0 0.0
    %1378 = vmatprep.subr.mxu0 0.0
    %1379 = vmatpush1.msra.mxu0 0.0
    %1380 = vmatprep.subr.mxu0 0.0
    %1381 = vmatpush1.msra.mxu0 0.0
    %1382 = vmatprep.subr.mxu0 0.0
    %1383 = vmatpush1.msra.mxu0 0.0
    %1384 = vmatprep.subr.mxu0 0.0
    %1385 = vmatpush1.msra.mxu0 0.0
    %1386 = vmatprep.subr.mxu0 0.0
    %1387 = vmatpush1.msra.mxu0 0.0
    %1388 = vmatprep.subr.mxu0 0.0
    %1389 = vmatpush1.msra.mxu0 0.0
    %1390 = vmatprep.subr.mxu0 0.0
    %1391 = vmatpush1.msra.mxu0 0.0
    %1392 = vmatprep.subr.mxu0 0.0
    %1393 = vmatpush1.msra.mxu0 0.0
    %1394 = vmatprep.subr.mxu0 0.0
    %1395 = vmatpush1.msra.mxu0 0.0
    %1396 = vmatprep.mubr.f32.mxu0 0.0
    %1397 = vmatmul.mubr.f32.gmra.mrb[0].mxu0 %v1330
    %v1398 = vpop.f32.mrb[0].mxu0
    %v1399 = vadd.f32 0.0, %v1398
    %v1400 = vpop.f32.mrb[0].mxu0
    %1401 = vdwg.mxu0
    %v1402 = vadd.f32 %v1328, %v1399
    %v1403 = vtanh.pop %v1402
    %v1404 = vld [vmem:[#allocation3 + $0x28] sm:$0xff]
    %v1406 = vsel %vm13, %v1403, 0
    %1408 = vmatprep.subr.mxu0 0.0
    %1409 = vmatpush1.msra.mxu0 %v862
    %1410 = vmatprep.subr.mxu0 0.0
    %1411 = vmatpush1.msra.mxu0 %v863
    %1412 = vmatprep.subr.mxu0 0.0
    %1413 = vmatpush1.msra.mxu0 %v864
    %1414 = vmatprep.subr.mxu0 0.0
    %1415 = vmatpush1.msra.mxu0 %v865
    %1416 = vmatprep.subr.mxu0 0.0
    %1417 = vmatpush1.msra.mxu0 %v866
    %1418 = vmatprep.subr.mxu0 0.0
    %1419 = vmatpush1.msra.mxu0 %v867
    %1420 = vmatprep.subr.mxu0 0.0
    %1421 = vmatpush1.msra.mxu0 %v868
    %1422 = vmatprep.subr.mxu0 0.0
    %1423 = vmatpush1.msra.mxu0 %v869
    %1424 = vmatprep.subr.mxu0 0.0
    %1425 = vmatpush1.msra.mxu0 0.0
    %1426 = vmatprep.subr.mxu0 0.0
    %1427 = vmatpush1.msra.mxu0 0.0
    %1428 = vmatprep.subr.mxu0 0.0
    %1429 = vmatpush1.msra.mxu0 0.0
    %1430 = vmatprep.subr.mxu0 0.0
    %1431 = vmatpush1.msra.mxu0 0.0
    %1432 = vmatprep.subr.mxu0 0.0
    %1433 = vmatpush1.msra.mxu0 0.0
    %1434 = vmatprep.subr.mxu0 0.0
    %1435 = vmatpush1.msra.mxu0 0.0
    %1436 = vmatprep.subr.mxu0 0.0
    %1437 = vmatpush1.msra.mxu0 0.0
    %1438 = vmatprep.subr.mxu0 0.0
    %1439 = vmatpush1.msra.mxu0 0.0
    %1440 = vmatprep.subr.mxu0 0.0
    %1441 = vmatpush1.msra.mxu0 0.0
    %1442 = vmatprep.subr.mxu0 0.0
    %1443 = vmatpush1.msra.mxu0 0.0
    %1444 = vmatprep.subr.mxu0 0.0
    %1445 = vmatpush1.msra.mxu0 0.0
    %1446 = vmatprep.subr.mxu0 0.0
    %1447 = vmatpush1.msra.mxu0 0.0
    %1448 = vmatprep.subr.mxu0 0.0
    %1449 = vmatpush1.msra.mxu0 0.0
    %1450 = vmatprep.subr.mxu0 0.0
    %1451 = vmatpush1.msra.mxu0 0.0
    %1452 = vmatprep.subr.mxu0 0.0
    %1453 = vmatpush1.msra.mxu0 0.0
    %1454 = vmatprep.subr.mxu0 0.0
    %1455 = vmatpush1.msra.mxu0 0.0
    %1456 = vmatprep.subr.mxu0 0.0
    %1457 = vmatpush1.msra.mxu0 0.0
    %1458 = vmatprep.subr.mxu0 0.0
    %1459 = vmatpush1.msra.mxu0 0.0
    %1460 = vmatprep.subr.mxu0 0.0
    %1461 = vmatpush1.msra.mxu0 0.0
    %1462 = vmatprep.subr.mxu0 0.0
    %1463 = vmatpush1.msra.mxu0 0.0
    %1464 = vmatprep.subr.mxu0 0.0
    %1465 = vmatpush1.msra.mxu0 0.0
    %1466 = vmatprep.subr.mxu0 0.0
    %1467 = vmatpush1.msra.mxu0 0.0
    %1468 = vmatprep.subr.mxu0 0.0
    %1469 = vmatpush1.msra.mxu0 0.0
    %1470 = vmatprep.subr.mxu0 0.0
    %1471 = vmatpush1.msra.mxu0 0.0
    %1472 = vmatprep.mubr.f32.mxu0 0.0
    %1473 = vmatmul.mubr.f32.gmra.mrb[0].mxu0 %v1406
    %v1474 = vpop.f32.mrb[0].mxu0
    %v1475 = vadd.f32 0.0, %v1474
    %v1476 = vpop.f32.mrb[0].mxu0
    %1477 = vdwg.mxu0
    %v1478 = vadd.f32 %v1404, %v1475
    %v1479 = vtanh.pop %v1478
    %v1480 = vld [vmem:[#allocation3 + $0x30] sm:$0xff]
    %v1482 = vsel %vm13, %v1479, 0
    %1484 = vmatprep.subr.mxu0 0.0
    %1485 = vmatpush1.msra.mxu0 %v862
    %1486 = vmatprep.subr.mxu0 0.0
    %1487 = vmatpush1.msra.mxu0 %v863
    %1488 = vmatprep.subr.mxu0 0.0
    %1489 = vmatpush1.msra.mxu0 %v864
    %1490 = vmatprep.subr.mxu0 0.0
    %1491 = vmatpush1.msra.mxu0 %v865
    %1492 = vmatprep.subr.mxu0 0.0
    %1493 = vmatpush1.msra.mxu0 %v866
    %1494 = vmatprep.subr.mxu0 0.0
    %1495 = vmatpush1.msra.mxu0 %v867
    %1496 = vmatprep.subr.mxu0 0.0
    %1497 = vmatpush1.msra.mxu0 %v868
    %1498 = vmatprep.subr.mxu0 0.0
    %1499 = vmatpush1.msra.mxu0 %v869
    %1500 = vmatprep.subr.mxu0 0.0
    %1501 = vmatpush1.msra.mxu0 0.0
    %1502 = vmatprep.subr.mxu0 0.0
    %1503 = vmatpush1.msra.mxu0 0.0
    %1504 = vmatprep.subr.mxu0 0.0
    %1505 = vmatpush1.msra.mxu0 0.0
    %1506 = vmatprep.subr.mxu0 0.0
    %1507 = vmatpush1.msra.mxu0 0.0
    %1508 = vmatprep.subr.mxu0 0.0
    %1509 = vmatpush1.msra.mxu0 0.0
    %1510 = vmatprep.subr.mxu0 0.0
    %1511 = vmatpush1.msra.mxu0 0.0
    %1512 = vmatprep.subr.mxu0 0.0
    %1513 = vmatpush1.msra.mxu0 0.0
    %1514 = vmatprep.subr.mxu0 0.0
    %1515 = vmatpush1.msra.mxu0 0.0
    %1516 = vmatprep.subr.mxu0 0.0
    %1517 = vmatpush1.msra.mxu0 0.0
    %1518 = vmatprep.subr.mxu0 0.0
    %1519 = vmatpush1.msra.mxu0 0.0
    %1520 = vmatprep.subr.mxu0 0.0
    %1521 = vmatpush1.msra.mxu0 0.0
    %1522 = vmatprep.subr.mxu0 0.0
    %1523 = vmatpush1.msra.mxu0 0.0
    %1524 = vmatprep.subr.mxu0 0.0
    %1525 = vmatpush1.msra.mxu0 0.0
    %1526 = vmatprep.subr.mxu0 0.0
    %1527 = vmatpush1.msra.mxu0 0.0
    %1528 = vmatprep.subr.mxu0 0.0
    %1529 = vmatpush1.msra.mxu0 0.0
    %1530 = vmatprep.subr.mxu0 0.0
    %1531 = vmatpush1.msra.mxu0 0.0
    %1532 = vmatprep.subr.mxu0 0.0
    %1533 = vmatpush1.msra.mxu0 0.0
    %1534 = vmatprep.subr.mxu0 0.0
    %1535 = vmatpush1.msra.mxu0 0.0
    %1536 = vmatprep.subr.mxu0 0.0
    %1537 = vmatpush1.msra.mxu0 0.0
    %1538 = vmatprep.subr.mxu0 0.0
    %1539 = vmatpush1.msra.mxu0 0.0
    %1540 = vmatprep.subr.mxu0 0.0
    %1541 = vmatpush1.msra.mxu0 0.0
    %1542 = vmatprep.subr.mxu0 0.0
    %1543 = vmatpush1.msra.mxu0 0.0
    %1544 = vmatprep.subr.mxu0 0.0
    %1545 = vmatpush1.msra.mxu0 0.0
    %1546 = vmatprep.subr.mxu0 0.0
    %1547 = vmatpush1.msra.mxu0 0.0
    %1548 = vmatprep.mubr.f32.mxu0 0.0
    %1549 = vmatmul.mubr.f32.gmra.mrb[0].mxu0 %v1482
    %v1550 = vpop.f32.mrb[0].mxu0
    %v1551 = vadd.f32 0.0, %v1550
    %v1552 = vpop.f32.mrb[0].mxu0
    %1553 = vdwg.mxu0
    %v1554 = vadd.f32 %v1480, %v1551
    %v1555 = vtanh.pop %v1554
    %v1556 = vld [vmem:[#allocation3 + $0x38] sm:$0xff]
    %v1558 = vsel %vm13, %v1555, 0
    %1560 = vmatprep.subr.mxu0 0.0
    %1561 = vmatpush1.msra.mxu0 %v862
    %1562 = vmatprep.subr.mxu0 0.0
    %1563 = vmatpush1.msra.mxu0 %v863
    %1564 = vmatprep.subr.mxu0 0.0
    %1565 = vmatpush1.msra.mxu0 %v864
    %1566 = vmatprep.subr.mxu0 0.0
    %1567 = vmatpush1.msra.mxu0 %v865
    %1568 = vmatprep.subr.mxu0 0.0
    %1569 = vmatpush1.msra.mxu0 %v866
    %1570 = vmatprep.subr.mxu0 0.0
    %1571 = vmatpush1.msra.mxu0 %v867
    %1572 = vmatprep.subr.mxu0 0.0
    %1573 = vmatpush1.msra.mxu0 %v868
    %1574 = vmatprep.subr.mxu0 0.0
    %1575 = vmatpush1.msra.mxu0 %v869
    %1576 = vmatprep.subr.mxu0 0.0
    %1577 = vmatpush1.msra.mxu0 0.0
    %1578 = vmatprep.subr.mxu0 0.0
    %1579 = vmatpush1.msra.mxu0 0.0
    %1580 = vmatprep.subr.mxu0 0.0
    %1581 = vmatpush1.msra.mxu0 0.0
    %1582 = vmatprep.subr.mxu0 0.0
    %1583 = vmatpush1.msra.mxu0 0.0
    %1584 = vmatprep.subr.mxu0 0.0
    %1585 = vmatpush1.msra.mxu0 0.0
    %1586 = vmatprep.subr.mxu0 0.0
    %1587 = vmatpush1.msra.mxu0 0.0
    %1588 = vmatprep.subr.mxu0 0.0
    %1589 = vmatpush1.msra.mxu0 0.0
    %1590 = vmatprep.subr.mxu0 0.0
    %1591 = vmatpush1.msra.mxu0 0.0
    %1592 = vmatprep.subr.mxu0 0.0
    %1593 = vmatpush1.msra.mxu0 0.0
    %1594 = vmatprep.subr.mxu0 0.0
    %1595 = vmatpush1.msra.mxu0 0.0
    %1596 = vmatprep.subr.mxu0 0.0
    %1597 = vmatpush1.msra.mxu0 0.0
    %1598 = vmatprep.subr.mxu0 0.0
    %1599 = vmatpush1.msra.mxu0 0.0
    %1600 = vmatprep.subr.mxu0 0.0
    %1601 = vmatpush1.msra.mxu0 0.0
    %1602 = vmatprep.subr.mxu0 0.0
    %1603 = vmatpush1.msra.mxu0 0.0
    %1604 = vmatprep.subr.mxu0 0.0
    %1605 = vmatpush1.msra.mxu0 0.0
    %1606 = vmatprep.subr.mxu0 0.0
    %1607 = vmatpush1.msra.mxu0 0.0
    %1608 = vmatprep.subr.mxu0 0.0
    %1609 = vmatpush1.msra.mxu0 0.0
    %1610 = vmatprep.subr.mxu0 0.0
    %1611 = vmatpush1.msra.mxu0 0.0
    %1612 = vmatprep.subr.mxu0 0.0
    %1613 = vmatpush1.msra.mxu0 0.0
    %1614 = vmatprep.subr.mxu0 0.0
    %1615 = vmatpush1.msra.mxu0 0.0
    %1616 = vmatprep.subr.mxu0 0.0
    %1617 = vmatpush1.msra.mxu0 0.0
    %1618 = vmatprep.subr.mxu0 0.0
    %1619 = vmatpush1.msra.mxu0 0.0
    %1620 = vmatprep.subr.mxu0 0.0
    %1621 = vmatpush1.msra.mxu0 0.0
    %1622 = vmatprep.subr.mxu0 0.0
    %1623 = vmatpush1.msra.mxu0 0.0
    %1624 = vmatprep.mubr.f32.mxu0 0.0
    %1625 = vmatmul.mubr.f32.gmra.mrb[0].mxu0 %v1558
    %v1626 = vpop.f32.mrb[0].mxu0
    %v1627 = vadd.f32 0.0, %v1626
    %v1628 = vpop.f32.mrb[0].mxu0
    %1629 = vdwg.mxu0
    %v1630 = vadd.f32 %v1556, %v1627
    %v1631 = vtanh.pop %v1630
    %1632 = vrot.lane.b32.xlu0 %v1099, 96
    %v1633 = vpop.permute.xlu0 %1632
    %v1635 = vadd.f32 %v1631, %v1633
    %v1636 = vld [vmem:[%s1 + $0x110] sm:$0xff]
    %v1637 = vld [vmem:[%s1 + $0x118] sm:$0xff]
    %v1638 = vld [vmem:[%s1 + $0x120] sm:$0xff]
    %v1639 = vld [vmem:[%s1 + $0x128] sm:$0xff]
    %v1640 = vld [vmem:[%s1 + $0x130] sm:$0x1]
    %v1641 = vlaneseq
    %v1642 = vshrl.u32 %v1641, 7
    %v1643 = vsub.s32 0, %v1642
    %v1644 = vrot.slane %v1640, %v1643
    %v1646 = vsel %vm304, %v1635, 0
    %1648 = vmatprep.subr.mxu0 0.0
    %1649 = vmatpush1.msra.mxu0 %v1636
    %1650 = vmatprep.subr.mxu0 0.0
    %1651 = vmatpush1.msra.mxu0 %v1637
    %1652 = vmatprep.subr.mxu0 0.0
    %1653 = vmatpush1.msra.mxu0 %v1638
    %1654 = vmatprep.subr.mxu0 0.0
    %1655 = vmatpush1.msra.mxu0 %v1639
    %1656 = vmatprep.subr.mxu0 0.0
    %1657 = vmatpush1.msra.mxu0 0.0
    %1658 = vmatprep.subr.mxu0 0.0
    %1659 = vmatpush1.msra.mxu0 0.0
    %1660 = vmatprep.subr.mxu0 0.0
    %1661 = vmatpush1.msra.mxu0 0.0
    %1662 = vmatprep.subr.mxu0 0.0
    %1663 = vmatpush1.msra.mxu0 0.0
    %1664 = vmatprep.subr.mxu0 0.0
    %1665 = vmatpush1.msra.mxu0 0.0
    %1666 = vmatprep.subr.mxu0 0.0
    %1667 = vmatpush1.msra.mxu0 0.0
    %1668 = vmatprep.subr.mxu0 0.0
    %1669 = vmatpush1.msra.mxu0 0.0
    %1670 = vmatprep.subr.mxu0 0.0
    %1671 = vmatpush1.msra.mxu0 0.0
    %1672 = vmatprep.subr.mxu0 0.0
    %1673 = vmatpush1.msra.mxu0 0.0
    %1674 = vmatprep.subr.mxu0 0.0
    %1675 = vmatpush1.msra.mxu0 0.0
    %1676 = vmatprep.subr.mxu0 0.0
    %1677 = vmatpush1.msra.mxu0 0.0
    %1678 = vmatprep.subr.mxu0 0.0
    %1679 = vmatpush1.msra.mxu0 0.0
    %1680 = vmatprep.subr.mxu0 0.0
    %1681 = vmatpush1.msra.mxu0 0.0
    %1682 = vmatprep.subr.mxu0 0.0
    %1683 = vmatpush1.msra.mxu0 0.0
    %1684 = vmatprep.subr.mxu0 0.0
    %1685 = vmatpush1.msra.mxu0 0.0
    %1686 = vmatprep.subr.mxu0 0.0
    %1687 = vmatpush1.msra.mxu0 0.0
    %1688 = vmatprep.subr.mxu0 0.0
    %1689 = vmatpush1.msra.mxu0 0.0
    %1690 = vmatprep.subr.mxu0 0.0
    %1691 = vmatpush1.msra.mxu0 0.0
    %1692 = vmatprep.subr.mxu0 0.0
    %1693 = vmatpush1.msra.mxu0 0.0
    %1694 = vmatprep.subr.mxu0 0.0
    %1695 = vmatpush1.msra.mxu0 0.0
    %1696 = vmatprep.subr.mxu0 0.0
    %1697 = vmatpush1.msra.mxu0 0.0
    %1698 = vmatprep.subr.mxu0 0.0
    %1699 = vmatpush1.msra.mxu0 0.0
    %1700 = vmatprep.subr.mxu0 0.0
    %1701 = vmatpush1.msra.mxu0 0.0
    %1702 = vmatprep.subr.mxu0 0.0
    %1703 = vmatpush1.msra.mxu0 0.0
    %1704 = vmatprep.subr.mxu0 0.0
    %1705 = vmatpush1.msra.mxu0 0.0
    %1706 = vmatprep.subr.mxu0 0.0
    %1707 = vmatpush1.msra.mxu0 0.0
    %1708 = vmatprep.subr.mxu0 0.0
    %1709 = vmatpush1.msra.mxu0 0.0
    %1710 = vmatprep.subr.mxu0 0.0
    %1711 = vmatpush1.msra.mxu0 0.0
    %1712 = vmatprep.mubr.f32.mxu0 0.0
    %1713 = vmatmul.mubr.f32.gmra.mrb[0].mxu0 %v1646
    %v1714 = vpop.f32.mrb[0].mxu0
    %v1715 = vadd.f32 %v1644, %v1714
    %v1716 = vpop.f32.mrb[0].mxu0
    %1717 = vdwg.mxu0
    %vm1718 = vcmask 31744
    %v1719 = vsel %vm1718, %v1715, -inf
    %1720 = vmax.xlane.f32.xlu0 %v1719
    %v1721 = vpop.xlane.xlu0 %1720
    %v1722 = vsub.f32 %v1715, %v1721
    %v1723 = vmul.f32 %v1722, 1.442695
    %v1724 = vpow.pop %v1723
    %v1725 = vsel %vm1718, %v1724, 0.0
    %1726 = vadd.xlane.f32.xlu0 %v1725
    %v1727 = vpop.xlane.xlu0 %1726
    %v1728 = vrcp.pop %v1727
    %v1729 = vmul.f32 %v1724, %v1728
    %vm1730 = vcmask 25600
    %1731 = vst.msk [vmem:[#allocation4] sm:$0x3] %vm1730, %v1729
    // Predicated region
    $region10: #{genotyping_rnn_forward.1} parent=1 // pred_check
      _
    $region11: #{genotyping_rnn_forward.1} parent=1 // pred_check_branch
      %1733 = sbr.rel (0) target = $region13
    $region12: #{genotyping_rnn_forward.1} parent=1 // pred_region
      %s1735 = ssub.s32 32, 32
      %1736 = vsyncadd [#allocation5], %s1735
      %s1738 = sshll.u32 [#allocation4], 4
      %s1739 = int_to_ptr.vmem [resolvable:$true] %s1738
      %1741 = dma.vmem_to_hbm [thread:$0]  %s1739, 32, %s2, [#allocation5]
    $region13: #{genotyping_rnn_forward.1} parent=1 // pred_fallthru
      _
    // Predicated region
    $region14: #{genotyping_rnn_forward.1} parent=1 // pred_check
      _
    $region15: #{genotyping_rnn_forward.1} parent=1 // pred_check_branch
      %1743 = sbr.rel (0) target = $region17
    $region16: #{genotyping_rnn_forward.1} parent=1 // pred_region
      %1744 = dma.done [#allocation5], 32
    $region17: #{genotyping_rnn_forward.1} parent=1 // pred_fallthru
      _
    %1745 = vsyncpa [#allocation5], 1

</llo_original>
